<compile_context>
chip_gen: v7x
topology: tpu7x:2x2x1
jax: 0.10.0
libtpu: 0.0.40
codegen_flags: <defaults>
</compile_context>

<pallas_src>
import numpy as np

import jax
import jax.numpy as jnp
from jax import lax
from jax.experimental import pallas as pl
from jax.experimental.pallas import tpu as pltpu


# ----------------------------- kernel helpers ------------------------------


def _rational(t, num, den):
    """Rational 'A': (a0+..+a5 x^5) / (1 + |b0 x + b1 x^2 + b2 x^3 + b3 x^4|).

    num: list of 6 (1, W*C) rows, den: list of 4 (1, W*C) rows (hoisted once
    per kernel invocation).  Divide = EUP reciprocal + one Newton step.
    """
    p = num[5]
    for i in range(4, -1, -1):
        p = p * t + num[i]
    q = den[3]
    for j in range(2, -1, -1):
        q = q * t + den[j]
    d = 1.0 + jnp.abs(q * t)            # 1 + |b0 x + b1 x^2 + b2 x^3 + b3 x^4|
    r = pl.reciprocal(d, approx=True)
    r = r * (2.0 - d * r)               # one Newton refinement (d >= 1, safe)
    return p * r


# --------------------------------- kernel ----------------------------------


def rational_block_kernel(x_ref, w1_ref, b1_ref, w2_ref, b2_ref,
                          num_ref, den_ref, o_ref):
    Nb, H, wc = x_ref.shape             # identity shortcut => wc_in == wc_out
    M = Nb * H

    # Hoist the small coefficient / bias rows once per invocation.
    b1 = b1_ref[...]                    # (1, wc)
    b2 = b2_ref[...]
    num = [num_ref[i] for i in range(6)]
    den = [den_ref[j] for j in range(4)]

    def conv_lhs(v):
        # v: (Nb, H, wc) f32 -> (M, 3*wc) bf16 im2col LHS covering the 3 kh
        # taps; kw taps + W zero-padding are folded into the banded weights.
        z = jnp.zeros((Nb, 1, wc), v.dtype)
        up = jnp.concatenate([z, v[:, :H - 1, :]], axis=1)   # row h-1 (kh=0)
        dn = jnp.concatenate([v[:, 1:, :], z], axis=1)       # row h+1 (kh=2)
        cat = jnp.concatenate([up, v, dn], axis=-1)          # (Nb, H, 3*wc)
        return cat.reshape(M, 3 * wc).astype(jnp.bfloat16)

    # --- conv1 (BN1 scale folded into w1) + bias + rationals #1 -------------
    t = jnp.dot(conv_lhs(x_ref[...]), w1_ref[...],
                preferred_element_type=jnp.float32)           # (M, wc) f32
    t = _rational(t + b1, num, den)

    # --- conv2 (BN2 scale folded into w2) + bias + shortcut + rationals #2 --
    t2 = jnp.dot(conv_lhs(t.reshape(Nb, H, wc)), w2_ref[...],
                 preferred_element_type=jnp.float32)
    # identity shortcut (stride=1, downsample=False => nn.Sequential() == id);
    # re-read the x block here instead of keeping it live across both convs.
    t2 = t2 + b2 + x_ref[...].reshape(M, wc)
    o_ref[...] = _rational(t2, num, den).reshape(Nb, H, wc).astype(o_ref.dtype)


# -------------------------------- wrappers -----------------------------------


def _pick_block_batch(N, H, max_rows=512):
    """Largest Nb dividing N with Nb*H <= max_rows, preferring a grid >= 2."""
    divs = [d for d in range(1, N + 1) if N % d == 0 and d * H <= max_rows]
    if not divs:
        return 1
    two_step = [d for d in divs if N // d >= 2]
    return max(two_step) if two_step else max(divs)


def _rational_block_slab(x_slab, kp, nb):
    """Hot path: x_slab (N, H, W*Cin) f32 -> (N, H, W*Cout) f32."""
    N, H, wc_in = x_slab.shape
    wc_out = kp["w1b"].shape[1]
    assert wc_in == wc_out, "identity shortcut needs planes_in == planes_out"
    assert N % nb == 0

    grid_spec = pltpu.PrefetchScalarGridSpec(
        num_scalar_prefetch=0,
        grid=(N // nb,),
        in_specs=[
            pl.BlockSpec((nb, H, wc_in), lambda n: (n, 0, 0)),   # x slab block
            pl.BlockSpec(kp["w1b"].shape, lambda n: (0, 0)),     # banded w1*s1 (bf16)
            pl.BlockSpec((1, wc_out), lambda n: (0, 0)),         # BN1 bias row
            pl.BlockSpec(kp["w2b"].shape, lambda n: (0, 0)),     # banded w2*s2 (bf16)
            pl.BlockSpec((1, wc_out), lambda n: (0, 0)),         # BN2 bias row
            pl.BlockSpec((6, 1, wc_out), lambda n: (0, 0, 0)),   # rational num
            pl.BlockSpec((4, 1, wc_out), lambda n: (0, 0, 0)),   # rational den
        ],
        out_specs=pl.BlockSpec((nb, H, wc_out), lambda n: (n, 0, 0)),
    )
    return pl.pallas_call(
        rational_block_kernel,
        out_shape=jax.ShapeDtypeStruct((N, H, wc_out), jnp.float32),
        grid_spec=grid_spec,
        compiler_params=pltpu.CompilerParams(
            dimension_semantics=("parallel",),       # megacore split on v7x
            vmem_limit_bytes=32 * 1024 * 1024,       # far above ~1 MiB used
        ),
    )(x_slab, kp["w1b"], kp["b1"], kp["w2b"], kp["b2"], kp["num"], kp["den"])


def rational_basic_block(x_nchw, kp):
    """NCHW convenience wrapper mirroring the PyTorch module interface."""
    N, c_in, H, W = x_nchw.shape
    c_out = kp["cout"]
    nb = _pick_block_batch(N, H)
    x_slab = jnp.transpose(x_nchw, (0, 2, 3, 1)).reshape(N, H, W * c_in)
    out_slab = _rational_block_slab(x_slab, kp, nb)
    return jnp.transpose(out_slab.reshape(N, H, W, c_out), (0, 3, 1, 2))


# ------------------------- deterministic parameters -------------------------


def _banded_conv_weight(w_oihw, W):
    """(Cout, Cin, 3, 3) PyTorch weight -> banded (3*W*Cin, W*Cout) f32 matrix.

    Row index = kh*W*Cin + w_in*Cin + c_in, column = w_out*Cout + c_out.
    The kw band structure also realizes zero-padding along W.
    """
    w = np.asarray(w_oihw)
    c_out, c_in = w.shape[0], w.shape[1]
    bw = np.zeros((3 * W * c_in, W * c_out), np.float32)
    for kh in range(3):
        for kw in range(3):
            tap = w[:, :, kh, kw].T                       # (Cin, Cout)
            for wo in range(W):
                wi = wo + kw - 1
                if 0 <= wi < W:
                    r = kh * W * c_in + wi * c_in
                    c = wo * c_out
                    bw[r:r + c_in, c:c + c_out] += tap
    return bw


def make_params(key, planes_in, planes_out, w_spatial, eps=1e-5):
    assert planes_out % 4 == 0, "multi_variant_rationals needs channels % 4 == 0"
    ks = jax.random.split(key, 12)
    W = w_spatial

    # conv weights, PyTorch layout (Cout, Cin, kh, kw)
    w1_t = 0.1 * jax.random.normal(ks[0], (planes_out, planes_in, 3, 3), jnp.float32)
    w2_t = 0.1 * jax.random.normal(ks[1], (planes_out, planes_out, 3, 3), jnp.float32)

    def bn(k1, k2, k3, k4, c):
        gamma = 1.0 + 0.1 * jax.random.normal(k1, (c,), jnp.float32)
        beta = 0.1 * jax.random.normal(k2, (c,), jnp.float32)
        mean = 0.1 * jax.random.normal(k3, (c,), jnp.float32)
        var = jax.random.uniform(k4, (c,), jnp.float32, 0.5, 1.5)
        scale = gamma / jnp.sqrt(var + eps)
        bias = beta - mean * scale
        return scale, bias

    s1, b1 = bn(ks[2], ks[3], ks[4], ks[5], planes_out)
    s2, b2 = bn(ks[6], ks[7], ks[8], ks[9], planes_out)

    # Rational coefficients: 4 groups (r, g, b, c), numerator deg 5, denom deg 4.
    num_g = 0.5 * jax.random.normal(ks[10], (4, 6), jnp.float32)
    den_g = 0.5 * jax.random.normal(ks[11], (4, 4), jnp.float32)
    rp = planes_out // 4
    num_pc = jnp.transpose(jnp.repeat(num_g, rp, axis=0), (1, 0))  # (6, C)
    den_pc = jnp.transpose(jnp.repeat(den_g, rp, axis=0), (1, 0))  # (4, C)

    def lane(v):  # (C,) -> (W*C,) matching slab lane index w*C + c
        return jnp.tile(v, (W,))

    # Banded weights with the BN scale folded into the columns in f32, then
    # cast to bf16 (MXU operand).
    w1b = jnp.asarray(_banded_conv_weight(w1_t, W))
    w2b = jnp.asarray(_banded_conv_weight(w2_t, W))
    w1b_s = (w1b * lane(s1)[None, :]).astype(jnp.bfloat16)
    w2b_s = (w2b * lane(s2)[None, :]).astype(jnp.bfloat16)

    kernel_params = {
        "w1b": w1b_s,
        "w2b": w2b_s,
        "b1": lane(b1).reshape(1, W * planes_out),
        "b2": lane(b2).reshape(1, W * planes_out),
        "num": jnp.tile(num_pc, (1, W)).reshape(6, 1, W * planes_out),
        "den": jnp.tile(den_pc, (1, W)).reshape(4, 1, W * planes_out),
        "cout": planes_out,
    }
    raw = {"w1_t": w1_t, "w2_t": w2_t, "s1": s1, "b1": b1, "s2": s2, "b2": b2,
           "num_pc": num_pc, "den_pc": den_pc}
    return kernel_params, raw


# ----------------------------- pure-JAX reference ---------------------------


def _ref_rational(t, num_pc, den_pc):
    nc = num_pc[:, None, :, None, None]  # (6, 1, C, 1, 1)
    dc = den_pc[:, None, :, None, None]  # (4, 1, C, 1, 1)
    num = nc[5]
    for i in range(4, -1, -1):
        num = num * t + nc[i]
    den = dc[3]
    for j in range(2, -1, -1):
        den = den * t + dc[j]
    return num / (1.0 + jnp.abs(den * t))


def reference(x, raw):
    """Pure-JAX reference.  Mirrors the kernel's deliberate modeling choices
    (BN scale folded into the conv weight in f32, bf16 conv operands with f32
    accumulation) so the check validates the fused-kernel structure itself."""
    dn = ("NCHW", "OIHW", "NCHW")
    w1_eff = (raw["w1_t"] * raw["s1"][:, None, None, None]).astype(jnp.bfloat16)
    w2_eff = (raw["w2_t"] * raw["s2"][:, None, None, None]).astype(jnp.bfloat16)

    t = lax.conv_general_dilated(
        x.astype(jnp.bfloat16), w1_eff, (1, 1), "SAME",
        dimension_numbers=dn, preferred_element_type=jnp.float32)
    t = t + raw["b1"][None, :, None, None]
    t = _ref_rational(t, raw["num_pc"], raw["den_pc"])

    t2 = lax.conv_general_dilated(
        t.astype(jnp.bfloat16), w2_eff, (1, 1), "SAME",
        dimension_numbers=dn, preferred_element_type=jnp.float32)
    t2 = t2 + raw["b2"][None, :, None, None] + x
    return _ref_rational(t2, raw["num_pc"], raw["den_pc"])


# ----------------------------------- main ------------------------------------


if __name__ == "__main__":
    key = jax.random.PRNGKey(0)
    k_x, k_p = jax.random.split(key)

    # planes_in == planes_out (identity shortcut); W*C = 128 -> lane-dense
    # slabs.  N=16 with Nb=8 per block gives M = Nb*H = 128 matmul rows per
    # step and an even 2-step parallel grid (both TCs busy on v7x).
    N, C, H, W = 16, 8, 16, 16
    x = jax.random.normal(k_x, (N, C, H, W), jnp.float32)
    kernel_params, raw = make_params(k_p, C, C, W)

    out = jax.block_until_ready(rational_basic_block(x, kernel_params))
    ref = jax.block_until_ready(reference(x, raw))

    assert out.shape == (N, C, H, W)
    assert bool(jnp.all(jnp.isfinite(out)))
    # Kernel and reference use identical bf16 scaled-weight operands with f32
    # accumulation; tolerance covers accumulation-order / reciprocal deltas.
    assert bool(jnp.allclose(out, ref, rtol=1e-2, atol=1e-2)), "mismatch vs reference"

    print("KERNEL_OK")
</pallas_src>

<mosaic_0001>
module attributes {stable_mosaic.version = 11 : i64} {
  func.func @rational_block_kernel(%arg0: i32, %arg1: memref<8x16x128xf32, #tpu.memory_space<vmem>>, %arg2: memref<384x128xbf16, #tpu.memory_space<vmem>>, %arg3: memref<1x128xf32, #tpu.memory_space<vmem>>, %arg4: memref<384x128xbf16, #tpu.memory_space<vmem>>, %arg5: memref<1x128xf32, #tpu.memory_space<vmem>>, %arg6: memref<6x1x128xf32, #tpu.memory_space<vmem>>, %arg7: memref<4x1x128xf32, #tpu.memory_space<vmem>>, %arg8: memref<8x16x128xf32, #tpu.memory_space<vmem>>) attributes {dimension_semantics = [#tpu.dimension_semantics<parallel>], iteration_bounds = array<i64: 2>, scalar_prefetch = 0 : i64, scratch_operands = 0 : i64, tpu.core_type = #tpu.core_type<tc>, window_params = [{transform_indices = @transform_0, window_bounds = array<i64: 8, 16, 128>}, {pipeline_mode = #tpu.pipeline_mode<synchronous>, transform_indices = @transform_1, window_bounds = array<i64: 384, 128>}, {pipeline_mode = #tpu.pipeline_mode<synchronous>, transform_indices = @transform_2, window_bounds = array<i64: 1, 128>}, {pipeline_mode = #tpu.pipeline_mode<synchronous>, transform_indices = @transform_3, window_bounds = array<i64: 384, 128>}, {pipeline_mode = #tpu.pipeline_mode<synchronous>, transform_indices = @transform_4, window_bounds = array<i64: 1, 128>}, {pipeline_mode = #tpu.pipeline_mode<synchronous>, transform_indices = @transform_5, window_bounds = array<i64: 6, 1, 128>}, {pipeline_mode = #tpu.pipeline_mode<synchronous>, transform_indices = @transform_6, window_bounds = array<i64: 4, 1, 128>}, {transform_indices = @transform_7, window_bounds = array<i64: 8, 16, 128>}]} {
    %c0 = arith.constant 0 : index
    %c0_0 = arith.constant 0 : index
    %0 = vector.load %arg3[%c0, %c0_0] : memref<1x128xf32, #tpu.memory_space<vmem>>, vector<1x128xf32>
    %c0_1 = arith.constant 0 : index
    %c0_2 = arith.constant 0 : index
    %1 = vector.load %arg5[%c0_1, %c0_2] : memref<1x128xf32, #tpu.memory_space<vmem>>, vector<1x128xf32>
    %c0_3 = arith.constant 0 : index
    %c0_4 = arith.constant 0 : index
    %c0_5 = arith.constant 0 : index
    %2 = vector.load %arg6[%c0_3, %c0_4, %c0_5] : memref<6x1x128xf32, #tpu.memory_space<vmem>>, vector<1x1x128xf32>
    %3 = vector.shape_cast %2 : vector<1x1x128xf32> to vector<1x128xf32>
    %c1 = arith.constant 1 : index
    %c0_6 = arith.constant 0 : index
    %c0_7 = arith.constant 0 : index
    %4 = vector.load %arg6[%c1, %c0_6, %c0_7] : memref<6x1x128xf32, #tpu.memory_space<vmem>>, vector<1x1x128xf32>
    %5 = vector.shape_cast %4 : vector<1x1x128xf32> to vector<1x128xf32>
    %c2 = arith.constant 2 : index
    %c0_8 = arith.constant 0 : index
    %c0_9 = arith.constant 0 : index
    %6 = vector.load %arg6[%c2, %c0_8, %c0_9] : memref<6x1x128xf32, #tpu.memory_space<vmem>>, vector<1x1x128xf32>
    %7 = vector.shape_cast %6 : vector<1x1x128xf32> to vector<1x128xf32>
    %c3 = arith.constant 3 : index
    %c0_10 = arith.constant 0 : index
    %c0_11 = arith.constant 0 : index
    %8 = vector.load %arg6[%c3, %c0_10, %c0_11] : memref<6x1x128xf32, #tpu.memory_space<vmem>>, vector<1x1x128xf32>
    %9 = vector.shape_cast %8 : vector<1x1x128xf32> to vector<1x128xf32>
    %c4 = arith.constant 4 : index
    %c0_12 = arith.constant 0 : index
    %c0_13 = arith.constant 0 : index
    %10 = vector.load %arg6[%c4, %c0_12, %c0_13] : memref<6x1x128xf32, #tpu.memory_space<vmem>>, vector<1x1x128xf32>
    %11 = vector.shape_cast %10 : vector<1x1x128xf32> to vector<1x128xf32>
    %c5 = arith.constant 5 : index
    %c0_14 = arith.constant 0 : index
    %c0_15 = arith.constant 0 : index
    %12 = vector.load %arg6[%c5, %c0_14, %c0_15] : memref<6x1x128xf32, #tpu.memory_space<vmem>>, vector<1x1x128xf32>
    %13 = vector.shape_cast %12 : vector<1x1x128xf32> to vector<1x128xf32>
    %c0_16 = arith.constant 0 : index
    %c0_17 = arith.constant 0 : index
    %c0_18 = arith.constant 0 : index
    %14 = vector.load %arg7[%c0_16, %c0_17, %c0_18] : memref<4x1x128xf32, #tpu.memory_space<vmem>>, vector<1x1x128xf32>
    %15 = vector.shape_cast %14 : vector<1x1x128xf32> to vector<1x128xf32>
    %c1_19 = arith.constant 1 : index
    %c0_20 = arith.constant 0 : index
    %c0_21 = arith.constant 0 : index
    %16 = vector.load %arg7[%c1_19, %c0_20, %c0_21] : memref<4x1x128xf32, #tpu.memory_space<vmem>>, vector<1x1x128xf32>
    %17 = vector.shape_cast %16 : vector<1x1x128xf32> to vector<1x128xf32>
    %c2_22 = arith.constant 2 : index
    %c0_23 = arith.constant 0 : index
    %c0_24 = arith.constant 0 : index
    %18 = vector.load %arg7[%c2_22, %c0_23, %c0_24] : memref<4x1x128xf32, #tpu.memory_space<vmem>>, vector<1x1x128xf32>
    %19 = vector.shape_cast %18 : vector<1x1x128xf32> to vector<1x128xf32>
    %c3_25 = arith.constant 3 : index
    %c0_26 = arith.constant 0 : index
    %c0_27 = arith.constant 0 : index
    %20 = vector.load %arg7[%c3_25, %c0_26, %c0_27] : memref<4x1x128xf32, #tpu.memory_space<vmem>>, vector<1x1x128xf32>
    %21 = vector.shape_cast %20 : vector<1x1x128xf32> to vector<1x128xf32>
    %c0_28 = arith.constant 0 : index
    %c0_29 = arith.constant 0 : index
    %c0_30 = arith.constant 0 : index
    %22 = vector.load %arg1[%c0_28, %c0_29, %c0_30] : memref<8x16x128xf32, #tpu.memory_space<vmem>>, vector<8x16x128xf32>
    %cst = arith.constant 0.000000e+00 : f32
    %23 = vector.broadcast %cst : f32 to vector<8x1x128xf32>
    %24 = vector.extract_strided_slice %22 {offsets = [0, 0, 0], sizes = [8, 15, 128], strides = [1, 1, 1]} : vector<8x16x128xf32> to vector<8x15x128xf32>
    %25 = tpu.concatenate %23, %24 in 1 : vector<8x1x128xf32>, vector<8x15x128xf32> -> vector<8x16x128xf32>
    %26 = vector.extract_strided_slice %22 {offsets = [0, 1, 0], sizes = [8, 15, 128], strides = [1, 1, 1]} : vector<8x16x128xf32> to vector<8x15x128xf32>
    %27 = tpu.concatenate %26, %23 in 1 : vector<8x15x128xf32>, vector<8x1x128xf32> -> vector<8x16x128xf32>
    %28 = tpu.concatenate %25, %22, %27 in 2 : vector<8x16x128xf32>, vector<8x16x128xf32>, vector<8x16x128xf32> -> vector<8x16x384xf32>
    %29 = vector.shape_cast %28 : vector<8x16x384xf32> to vector<128x384xf32>
    %30 = arith.truncf %29 : vector<128x384xf32> to vector<128x384xbf16>
    %c0_31 = arith.constant 0 : index
    %c0_32 = arith.constant 0 : index
    %31 = vector.load %arg2[%c0_31, %c0_32] : memref<384x128xbf16, #tpu.memory_space<vmem>>, vector<384x128xbf16>
    %cst_33 = arith.constant dense<0.000000e+00> : vector<128x128xf32>
    %32 = tpu.matmul %30, %31, %cst_33 {dimension_numbers = #tpu.dot_dimension_numbers<[1], [0], [0], [1], [0, 0, 1, 1], [], []>} : vector<128x384xbf16>, vector<384x128xbf16>, vector<128x128xf32> -> vector<128x128xf32>
    %33 = vector.broadcast %0 : vector<1x128xf32> to vector<128x128xf32>
    %34 = arith.addf %32, %33 : vector<128x128xf32>
    %35 = vector.broadcast %13 : vector<1x128xf32> to vector<128x128xf32>
    %36 = arith.mulf %35, %34 : vector<128x128xf32>
    %37 = vector.broadcast %11 : vector<1x128xf32> to vector<128x128xf32>
    %38 = arith.addf %36, %37 : vector<128x128xf32>
    %39 = arith.mulf %38, %34 : vector<128x128xf32>
    %40 = vector.broadcast %9 : vector<1x128xf32> to vector<128x128xf32>
    %41 = arith.addf %39, %40 : vector<128x128xf32>
    %42 = arith.mulf %41, %34 : vector<128x128xf32>
    %43 = vector.broadcast %7 : vector<1x128xf32> to vector<128x128xf32>
    %44 = arith.addf %42, %43 : vector<128x128xf32>
    %45 = arith.mulf %44, %34 : vector<128x128xf32>
    %46 = vector.broadcast %5 : vector<1x128xf32> to vector<128x128xf32>
    %47 = arith.addf %45, %46 : vector<128x128xf32>
    %48 = arith.mulf %47, %34 : vector<128x128xf32>
    %49 = vector.broadcast %3 : vector<1x128xf32> to vector<128x128xf32>
    %50 = arith.addf %48, %49 : vector<128x128xf32>
    %51 = vector.broadcast %21 : vector<1x128xf32> to vector<128x128xf32>
    %52 = arith.mulf %51, %34 : vector<128x128xf32>
    %53 = vector.broadcast %19 : vector<1x128xf32> to vector<128x128xf32>
    %54 = arith.addf %52, %53 : vector<128x128xf32>
    %55 = arith.mulf %54, %34 : vector<128x128xf32>
    %56 = vector.broadcast %17 : vector<1x128xf32> to vector<128x128xf32>
    %57 = arith.addf %55, %56 : vector<128x128xf32>
    %58 = arith.mulf %57, %34 : vector<128x128xf32>
    %59 = vector.broadcast %15 : vector<1x128xf32> to vector<128x128xf32>
    %60 = arith.addf %58, %59 : vector<128x128xf32>
    %61 = arith.mulf %60, %34 : vector<128x128xf32>
    %62 = math.absf %61 : vector<128x128xf32>
    %cst_34 = arith.constant 1.000000e+00 : f32
    %63 = vector.broadcast %cst_34 : f32 to vector<128x128xf32>
    %64 = arith.addf %63, %62 : vector<128x128xf32>
    %65 = tpu.reciprocal %64 {approx = true} : vector<128x128xf32> -> vector<128x128xf32>
    %66 = arith.mulf %64, %65 : vector<128x128xf32>
    %cst_35 = arith.constant 2.000000e+00 : f32
    %67 = vector.broadcast %cst_35 : f32 to vector<128x128xf32>
    %68 = arith.subf %67, %66 : vector<128x128xf32>
    %69 = arith.mulf %65, %68 : vector<128x128xf32>
    %70 = arith.mulf %50, %69 : vector<128x128xf32>
    %71 = vector.shape_cast %70 : vector<128x128xf32> to vector<8x16x128xf32>
    %cst_36 = arith.constant 0.000000e+00 : f32
    %72 = vector.broadcast %cst_36 : f32 to vector<8x1x128xf32>
    %73 = vector.extract_strided_slice %71 {offsets = [0, 0, 0], sizes = [8, 15, 128], strides = [1, 1, 1]} : vector<8x16x128xf32> to vector<8x15x128xf32>
    %74 = tpu.concatenate %72, %73 in 1 : vector<8x1x128xf32>, vector<8x15x128xf32> -> vector<8x16x128xf32>
    %75 = vector.extract_strided_slice %71 {offsets = [0, 1, 0], sizes = [8, 15, 128], strides = [1, 1, 1]} : vector<8x16x128xf32> to vector<8x15x128xf32>
    %76 = tpu.concatenate %75, %72 in 1 : vector<8x15x128xf32>, vector<8x1x128xf32> -> vector<8x16x128xf32>
    %77 = tpu.concatenate %74, %71, %76 in 2 : vector<8x16x128xf32>, vector<8x16x128xf32>, vector<8x16x128xf32> -> vector<8x16x384xf32>
    %78 = vector.shape_cast %77 : vector<8x16x384xf32> to vector<128x384xf32>
    %79 = arith.truncf %78 : vector<128x384xf32> to vector<128x384xbf16>
    %c0_37 = arith.constant 0 : index
    %c0_38 = arith.constant 0 : index
    %80 = vector.load %arg4[%c0_37, %c0_38] : memref<384x128xbf16, #tpu.memory_space<vmem>>, vector<384x128xbf16>
    %cst_39 = arith.constant dense<0.000000e+00> : vector<128x128xf32>
    %81 = tpu.matmul %79, %80, %cst_39 {dimension_numbers = #tpu.dot_dimension_numbers<[1], [0], [0], [1], [0, 0, 1, 1], [], []>} : vector<128x384xbf16>, vector<384x128xbf16>, vector<128x128xf32> -> vector<128x128xf32>
    %82 = vector.broadcast %1 : vector<1x128xf32> to vector<128x128xf32>
    %83 = arith.addf %81, %82 : vector<128x128xf32>
    %c0_40 = arith.constant 0 : index
    %c0_41 = arith.constant 0 : index
    %c0_42 = arith.constant 0 : index
    %84 = vector.load %arg1[%c0_40, %c0_41, %c0_42] : memref<8x16x128xf32, #tpu.memory_space<vmem>>, vector<8x16x128xf32>
    %85 = vector.shape_cast %84 : vector<8x16x128xf32> to vector<128x128xf32>
    %86 = arith.addf %83, %85 : vector<128x128xf32>
    %87 = vector.broadcast %13 : vector<1x128xf32> to vector<128x128xf32>
    %88 = arith.mulf %87, %86 : vector<128x128xf32>
    %89 = vector.broadcast %11 : vector<1x128xf32> to vector<128x128xf32>
    %90 = arith.addf %88, %89 : vector<128x128xf32>
    %91 = arith.mulf %90, %86 : vector<128x128xf32>
    %92 = vector.broadcast %9 : vector<1x128xf32> to vector<128x128xf32>
    %93 = arith.addf %91, %92 : vector<128x128xf32>
    %94 = arith.mulf %93, %86 : vector<128x128xf32>
    %95 = vector.broadcast %7 : vector<1x128xf32> to vector<128x128xf32>
    %96 = arith.addf %94, %95 : vector<128x128xf32>
    %97 = arith.mulf %96, %86 : vector<128x128xf32>
    %98 = vector.broadcast %5 : vector<1x128xf32> to vector<128x128xf32>
    %99 = arith.addf %97, %98 : vector<128x128xf32>
    %100 = arith.mulf %99, %86 : vector<128x128xf32>
    %101 = vector.broadcast %3 : vector<1x128xf32> to vector<128x128xf32>
    %102 = arith.addf %100, %101 : vector<128x128xf32>
    %103 = vector.broadcast %21 : vector<1x128xf32> to vector<128x128xf32>
    %104 = arith.mulf %103, %86 : vector<128x128xf32>
    %105 = vector.broadcast %19 : vector<1x128xf32> to vector<128x128xf32>
    %106 = arith.addf %104, %105 : vector<128x128xf32>
    %107 = arith.mulf %106, %86 : vector<128x128xf32>
    %108 = vector.broadcast %17 : vector<1x128xf32> to vector<128x128xf32>
    %109 = arith.addf %107, %108 : vector<128x128xf32>
    %110 = arith.mulf %109, %86 : vector<128x128xf32>
    %111 = vector.broadcast %15 : vector<1x128xf32> to vector<128x128xf32>
    %112 = arith.addf %110, %111 : vector<128x128xf32>
    %113 = arith.mulf %112, %86 : vector<128x128xf32>
    %114 = math.absf %113 : vector<128x128xf32>
    %cst_43 = arith.constant 1.000000e+00 : f32
    %115 = vector.broadcast %cst_43 : f32 to vector<128x128xf32>
    %116 = arith.addf %115, %114 : vector<128x128xf32>
    %117 = tpu.reciprocal %116 {approx = true} : vector<128x128xf32> -> vector<128x128xf32>
    %118 = arith.mulf %116, %117 : vector<128x128xf32>
    %cst_44 = arith.constant 2.000000e+00 : f32
    %119 = vector.broadcast %cst_44 : f32 to vector<128x128xf32>
    %120 = arith.subf %119, %118 : vector<128x128xf32>
    %121 = arith.mulf %117, %120 : vector<128x128xf32>
    %122 = arith.mulf %102, %121 : vector<128x128xf32>
    %123 = vector.shape_cast %122 : vector<128x128xf32> to vector<8x16x128xf32>
    %c0_45 = arith.constant 0 : index
    %c0_46 = arith.constant 0 : index
    %c0_47 = arith.constant 0 : index
    %124 = vector.load %arg8[%c0_45, %c0_46, %c0_47] : memref<8x16x128xf32, #tpu.memory_space<vmem>>, vector<8x16x128xf32>
    tpu.vector_store %arg8[%c0_45, %c0_46, %c0_47], %123 {strides = array<i32>} : memref<8x16x128xf32, #tpu.memory_space<vmem>>, vector<8x16x128xf32>,
    return
  }
  func.func @transform_0(%arg0: i32) -> (i32, i32, i32) {
    %c0_i32 = arith.constant 0 : i32
    %c0_i32_0 = arith.constant 0 : i32
    %c0_i32_1 = arith.constant 0 : i32
    return %arg0, %c0_i32, %c0_i32_0 : i32, i32, i32
  }
  func.func @transform_1(%arg0: i32) -> (i32, i32) {
    %c0_i32 = arith.constant 0 : i32
    %c0_i32_0 = arith.constant 0 : i32
    %c0_i32_1 = arith.constant 0 : i32
    return %c0_i32, %c0_i32_0 : i32, i32
  }
  func.func @transform_2(%arg0: i32) -> (i32, i32) {
    %c0_i32 = arith.constant 0 : i32
    %c0_i32_0 = arith.constant 0 : i32
    %c0_i32_1 = arith.constant 0 : i32
    return %c0_i32, %c0_i32_0 : i32, i32
  }
  func.func @transform_3(%arg0: i32) -> (i32, i32) {
    %c0_i32 = arith.constant 0 : i32
    %c0_i32_0 = arith.constant 0 : i32
    %c0_i32_1 = arith.constant 0 : i32
    return %c0_i32, %c0_i32_0 : i32, i32
  }
  func.func @transform_4(%arg0: i32) -> (i32, i32) {
    %c0_i32 = arith.constant 0 : i32
    %c0_i32_0 = arith.constant 0 : i32
    %c0_i32_1 = arith.constant 0 : i32
    return %c0_i32, %c0_i32_0 : i32, i32
  }
  func.func @transform_5(%arg0: i32) -> (i32, i32, i32) {
    %c0_i32 = arith.constant 0 : i32
    %c0_i32_0 = arith.constant 0 : i32
    %c0_i32_1 = arith.constant 0 : i32
    %c0_i32_2 = arith.constant 0 : i32
    return %c0_i32, %c0_i32_0, %c0_i32_1 : i32, i32, i32
  }
  func.func @transform_6(%arg0: i32) -> (i32, i32, i32) {
    %c0_i32 = arith.constant 0 : i32
    %c0_i32_0 = arith.constant 0 : i32
    %c0_i32_1 = arith.constant 0 : i32
    %c0_i32_2 = arith.constant 0 : i32
    return %c0_i32, %c0_i32_0, %c0_i32_1 : i32, i32, i32
  }
  func.func @transform_7(%arg0: i32) -> (i32, i32, i32) {
    %c0_i32 = arith.constant 0 : i32
    %c0_i32_0 = arith.constant 0 : i32
    %c0_i32_1 = arith.constant 0 : i32
    return %arg0, %c0_i32, %c0_i32_0 : i32, i32, i32
  }
}

</mosaic_0001>

<llo_original>
// kernel: tpu_custom_call.1
$region0: #{tpu_custom_call.1}
  #allocation0 [shape = 'u32[]', space=smem, size = 0x4, offset = 0x4, fixed_abs, tag = 'smem constant byte address 0x4 - core index']
  #allocation1 [shape = 'u32[144,128]{1,0:T(1,128)}', space=vmem, size = 0x12000, scoped, tag = 'internal scratch']
  %s0 = inlined_call_operand.hbm [shape: f32[16,16,128], index: 0, kind: input, shape index: {}]
  %s1 = inlined_call_operand.hbm [shape: bf16[384,128], index: 1, kind: input, shape index: {}]
  %s2 = inlined_call_operand.vmem [shape: f32[1,128], index: 2, kind: input, shape index: {}]
  %s3 = inlined_call_operand.hbm [shape: bf16[384,128], index: 3, kind: input, shape index: {}]
  %s4 = inlined_call_operand.vmem [shape: f32[1,128], index: 4, kind: input, shape index: {}]
  %s5 = inlined_call_operand.vmem [shape: f32[6,1,128], index: 5, kind: input, shape index: {}]
  %s6 = inlined_call_operand.vmem [shape: f32[4,1,128], index: 6, kind: input, shape index: {}]
  %s7 = inlined_call_operand.hbm [shape: f32[16,16,128], index: 7, kind: output, shape index: {}]
  %s8 = sld [smem:[#allocation0]]
  $region73: #{tpu_custom_call.1} parent=0
    _
  %s10 = ssub.s32 1, %s8
  %s11 = scalar_select 0, %s10, %s8
  $region1: #{tpu_custom_call.1} parent=0
    #allocation2 [shape = 'u8[131072]{0}', space=vmem, size = 0x20000, scoped, tag = 'input window, operand 0']
    #allocation3 [shape = 's32[2]{0}', space=sflag, size = 0x8, scoped, tag = 'scoped memory for tpu_custom_call.1']
    #allocation4 [shape = 's32[2]{0}', space=sflag, size = 0x8, scoped, tag = 'scoped memory for tpu_custom_call.1']
    #allocation5 [shape = 'u8[98304]{0}', space=vmem, size = 0x18000, scoped, tag = 'input window, operand 1, single buffered']
    #allocation6 [shape = 's32[1]{0}', space=sflag, size = 0x4, scoped, tag = 'scoped memory for tpu_custom_call.1']
    #allocation7 [shape = 'u8[98304]{0}', space=vmem, size = 0x18000, scoped, tag = 'input window, operand 3, single buffered']
    #allocation8 [shape = 'u8[131072]{0}', space=vmem, size = 0x20000, scoped, tag = 'output window, operand 0']
    %12 = vsyncpa [#allocation3], 0
    %s13 = scalar_lea.sflag [#allocation3], 1
    %14 = vsyncpa %s13, 0
    %15 = vsyncpa [#allocation6], 0
    %16 = vsyncpa [#allocation4], 0
    %s17 = scalar_lea.sflag [#allocation4], 1
    %18 = vsyncpa %s17, 0
    loop: start=0, step=1, limit=4
    $region2: #{tpu_custom_call.1} parent=1 // loop_pre_header
      _
    $region3: #{tpu_custom_call.1} parent=1 // loop_header
      %s20 = sphi 0, %s24
      %p21 = scmp.ge.s32.totalorder %s20, 4
      %s30 = sphi 0, %s32
      %s33 = sphi 0, %s30
      %s34 = sphi 0, %s33
      %s50 = sphi 0, %s34
      %s54 = sphi 0, %s54
      %s56 = sphi 0, %s54
      %s57 = sphi 0, %s56
      %s71 = sphi 0, %s57
      %s75 = sphi 0, %s75
      %s77 = sphi 0, %s75
      %s78 = sphi 0, %s77
      %s92 = sphi 0, %s78
      %s96 = sphi 0, %s96
      %s98 = sphi 0, %s96
      %s99 = sphi 0, %s98
      %s113 = sphi 0, %s99
      %s117 = sphi 0, %s117
      %s119 = sphi 0, %s117
      %s120 = sphi 0, %s119
      %s134 = sphi 0, %s120
      %s138 = sphi 0, %s138
      %s140 = sphi 0, %s138
      %s141 = sphi 0, %s140
      %s155 = sphi 0, %s141
      %s159 = sphi 0, %s159
      %s161 = sphi 0, %s159
      %s162 = sphi 0, %s161
      %s176 = sphi 0, %s162
      %s182 = sphi 0, %s184
      %s185 = sphi 0, %s182
      %s186 = sphi 0, %s185
      %s202 = sphi 0, %s186
    $region4: #{tpu_custom_call.1} parent=1 // loop_header_branch
      %23 = sbr.rel (%p21) target = $region8
    $region5: #{tpu_custom_call.1} parent=1 // loop_body
      %s25 = ssub.s32 %s20, 1
      %s26 = ssub.s32 %s20, 2
      %s27 = sadd.s32 %s20, 1
      %s28 = ssub.s32 %s20, %s27
      %p29 = scmp.eq.s32.totalorder %s28, 0
      %s31 = sadd.s32 %s30, 1
      %s32 = scalar_select %p29, %s30, %s31
      %p35 = pneg %p29
      %p36 = scmp.eq.s32.totalorder %s20, 1
      %p37 = por %p35, %p36
      %p38 = scmp.ne.s32.totalorder %s30, %s33
      %p39 = scmp.eq.s32.totalorder %s20, 0
      %p40 = por %p38, %p39
      %p41 = scmp.ne.s32.totalorder %s30, %s33
      %p42 = scmp.eq.s32.totalorder %s25, 1
      %p43 = por %p41, %p42
      %p44 = scmp.ne.s32.totalorder %s33, %s34
      %p45 = scmp.eq.s32.totalorder %s25, 0
      %p46 = por %p44, %p45
      %p47 = scmp.ne.s32.totalorder %s33, %s34
      %p48 = scmp.eq.s32.totalorder %s26, 1
      %p49 = por %p47, %p48
      %p51 = scmp.ne.s32.totalorder %s34, %s50
      %p52 = scmp.eq.s32.totalorder %s26, 0
      %p53 = por %p51, %p52
      %s55 = sadd.s32 %s54, 1
      %p58 = scmp.eq.s32.totalorder %s20, 1
      %p59 = scmp.ne.s32.totalorder %s54, %s56
      %p60 = scmp.eq.s32.totalorder %s20, 0
      %p61 = por %p59, %p60
      %p62 = scmp.ne.s32.totalorder %s54, %s56
      %p63 = scmp.eq.s32.totalorder %s25, 1
      %p64 = por %p62, %p63
      %p65 = scmp.ne.s32.totalorder %s56, %s57
      %p66 = scmp.eq.s32.totalorder %s25, 0
      %p67 = por %p65, %p66
      %p68 = scmp.ne.s32.totalorder %s56, %s57
      %p69 = scmp.eq.s32.totalorder %s26, 1
      %p70 = por %p68, %p69
      %p72 = scmp.ne.s32.totalorder %s57, %s71
      %p73 = scmp.eq.s32.totalorder %s26, 0
      %p74 = por %p72, %p73
      %s76 = sadd.s32 %s75, 1
      %p79 = scmp.eq.s32.totalorder %s20, 1
      %p80 = scmp.ne.s32.totalorder %s75, %s77
      %p81 = scmp.eq.s32.totalorder %s20, 0
      %p82 = por %p80, %p81
      %p83 = scmp.ne.s32.totalorder %s75, %s77
      %p84 = scmp.eq.s32.totalorder %s25, 1
      %p85 = por %p83, %p84
      %p86 = scmp.ne.s32.totalorder %s77, %s78
      %p87 = scmp.eq.s32.totalorder %s25, 0
      %p88 = por %p86, %p87
      %p89 = scmp.ne.s32.totalorder %s77, %s78
      %p90 = scmp.eq.s32.totalorder %s26, 1
      %p91 = por %p89, %p90
      %p93 = scmp.ne.s32.totalorder %s78, %s92
      %p94 = scmp.eq.s32.totalorder %s26, 0
      %p95 = por %p93, %p94
      %s97 = sadd.s32 %s96, 1
      %p100 = scmp.eq.s32.totalorder %s20, 1
      %p101 = scmp.ne.s32.totalorder %s96, %s98
      %p102 = scmp.eq.s32.totalorder %s20, 0
      %p103 = por %p101, %p102
      %p104 = scmp.ne.s32.totalorder %s96, %s98
      %p105 = scmp.eq.s32.totalorder %s25, 1
      %p106 = por %p104, %p105
      %p107 = scmp.ne.s32.totalorder %s98, %s99
      %p108 = scmp.eq.s32.totalorder %s25, 0
      %p109 = por %p107, %p108
      %p110 = scmp.ne.s32.totalorder %s98, %s99
      %p111 = scmp.eq.s32.totalorder %s26, 1
      %p112 = por %p110, %p111
      %p114 = scmp.ne.s32.totalorder %s99, %s113
      %p115 = scmp.eq.s32.totalorder %s26, 0
      %p116 = por %p114, %p115
      %s118 = sadd.s32 %s117, 1
      %p121 = scmp.eq.s32.totalorder %s20, 1
      %p122 = scmp.ne.s32.totalorder %s117, %s119
      %p123 = scmp.eq.s32.totalorder %s20, 0
      %p124 = por %p122, %p123
      %p125 = scmp.ne.s32.totalorder %s117, %s119
      %p126 = scmp.eq.s32.totalorder %s25, 1
      %p127 = por %p125, %p126
      %p128 = scmp.ne.s32.totalorder %s119, %s120
      %p129 = scmp.eq.s32.totalorder %s25, 0
      %p130 = por %p128, %p129
      %p131 = scmp.ne.s32.totalorder %s119, %s120
      %p132 = scmp.eq.s32.totalorder %s26, 1
      %p133 = por %p131, %p132
      %p135 = scmp.ne.s32.totalorder %s120, %s134
      %p136 = scmp.eq.s32.totalorder %s26, 0
      %p137 = por %p135, %p136
      %s139 = sadd.s32 %s138, 1
      %p142 = scmp.eq.s32.totalorder %s20, 1
      %p143 = scmp.ne.s32.totalorder %s138, %s140
      %p144 = scmp.eq.s32.totalorder %s20, 0
      %p145 = por %p143, %p144
      %p146 = scmp.ne.s32.totalorder %s138, %s140
      %p147 = scmp.eq.s32.totalorder %s25, 1
      %p148 = por %p146, %p147
      %p149 = scmp.ne.s32.totalorder %s140, %s141
      %p150 = scmp.eq.s32.totalorder %s25, 0
      %p151 = por %p149, %p150
      %p152 = scmp.ne.s32.totalorder %s140, %s141
      %p153 = scmp.eq.s32.totalorder %s26, 1
      %p154 = por %p152, %p153
      %p156 = scmp.ne.s32.totalorder %s141, %s155
      %p157 = scmp.eq.s32.totalorder %s26, 0
      %p158 = por %p156, %p157
      %s160 = sadd.s32 %s159, 1
      %p163 = scmp.eq.s32.totalorder %s20, 1
      %p164 = scmp.ne.s32.totalorder %s159, %s161
      %p165 = scmp.eq.s32.totalorder %s20, 0
      %p166 = por %p164, %p165
      %p167 = scmp.ne.s32.totalorder %s159, %s161
      %p168 = scmp.eq.s32.totalorder %s25, 1
      %p169 = por %p167, %p168
      %p170 = scmp.ne.s32.totalorder %s161, %s162
      %p171 = scmp.eq.s32.totalorder %s25, 0
      %p172 = por %p170, %p171
      %p173 = scmp.ne.s32.totalorder %s161, %s162
      %p174 = scmp.eq.s32.totalorder %s26, 1
      %p175 = por %p173, %p174
      %p177 = scmp.ne.s32.totalorder %s162, %s176
      %p178 = scmp.eq.s32.totalorder %s26, 0
      %p179 = por %p177, %p178
      %s180 = ssub.s32 %s20, %s27
      %p181 = scmp.eq.s32.totalorder %s180, 0
      %s183 = sadd.s32 %s182, 1
      %s184 = scalar_select %p181, %s182, %s183
      %p187 = pneg %p181
      %p188 = scmp.eq.s32.totalorder %s20, 1
      %p189 = por %p187, %p188
      %p190 = scmp.ne.s32.totalorder %s182, %s185
      %p191 = scmp.eq.s32.totalorder %s20, 0
      %p192 = por %p190, %p191
      %p193 = scmp.ne.s32.totalorder %s182, %s185
      %p194 = scmp.eq.s32.totalorder %s25, 1
      %p195 = por %p193, %p194
      %p196 = scmp.ne.s32.totalorder %s185, %s186
      %p197 = scmp.eq.s32.totalorder %s25, 0
      %p198 = por %p196, %p197
      %p199 = scmp.ne.s32.totalorder %s185, %s186
      %p200 = scmp.eq.s32.totalorder %s26, 1
      %p201 = por %p199, %p200
      %p203 = scmp.ne.s32.totalorder %s186, %s202
      %p204 = scmp.eq.s32.totalorder %s26, 0
      %p205 = por %p203, %p204
      %p206 = scmp.le.s32.totalorder 1, %s20
      %p207 = scmp.lt.s32.totalorder %s20, 3
      %p208 = pnand %p206, %p207
      %p209 = pneg %p208
      // Predicated region
      $region9: #{tpu_custom_call.1} parent=5 // pred_check
        _
      $region10: #{tpu_custom_call.1} parent=5 // pred_check_branch
        %211 = sbr.rel (%p208) target = $region12
      $region11: #{tpu_custom_call.1} parent=5 // pred_region
        %s212 = ssub.s32 %s20, 1
        // Predicated region
        $region13: #{tpu_custom_call.1} parent=11 // pred_check
          %p213 = pneg %p67
        $region14: #{tpu_custom_call.1} parent=11 // pred_check_branch
          %215 = sbr.rel (%p213) target = $region16
        $region15: #{tpu_custom_call.1} parent=11 // pred_region
          %s217 = ssub.s32 3072, 3072
          %218 = vsyncadd [#allocation6], %s217
          %s219 = sshll.u32 [#allocation5], 4
          %s220 = int_to_ptr.vmem [resolvable:$true] %s219
          %225 = dma.hbm_to_vmem [thread:$0]  %s1, 3072, %s220, [#allocation6], 64, 64, 4
        $region16: #{tpu_custom_call.1} parent=11 // pred_fallthru
          _
        // Predicated region
        $region17: #{tpu_custom_call.1} parent=11 // pred_check
          %p226 = pneg %p88
        $region18: #{tpu_custom_call.1} parent=11 // pred_check_branch
          %228 = sbr.rel (%p226) target = $region20
        $region19: #{tpu_custom_call.1} parent=11 // pred_region
          _
        $region20: #{tpu_custom_call.1} parent=11 // pred_fallthru
          _
        // Predicated region
        $region21: #{tpu_custom_call.1} parent=11 // pred_check
          %p229 = pneg %p109
        $region22: #{tpu_custom_call.1} parent=11 // pred_check_branch
          %231 = sbr.rel (%p229) target = $region24
        $region23: #{tpu_custom_call.1} parent=11 // pred_region
          %s233 = ssub.s32 3072, 3072
          %234 = vsyncadd [#allocation6], %s233
          %s235 = sshll.u32 [#allocation7], 4
          %s236 = int_to_ptr.vmem [resolvable:$true] %s235
          %241 = dma.hbm_to_vmem [thread:$0]  %s3, 3072, %s236, [#allocation6], 64, 64, 4
        $region24: #{tpu_custom_call.1} parent=11 // pred_fallthru
          _
        // Predicated region
        $region25: #{tpu_custom_call.1} parent=11 // pred_check
          %p242 = pneg %p130
        $region26: #{tpu_custom_call.1} parent=11 // pred_check_branch
          %244 = sbr.rel (%p242) target = $region28
        $region27: #{tpu_custom_call.1} parent=11 // pred_region
          _
        $region28: #{tpu_custom_call.1} parent=11 // pred_fallthru
          _
        // Predicated region
        $region29: #{tpu_custom_call.1} parent=11 // pred_check
          %p245 = pneg %p151
        $region30: #{tpu_custom_call.1} parent=11 // pred_check_branch
          %247 = sbr.rel (%p245) target = $region32
        $region31: #{tpu_custom_call.1} parent=11 // pred_region
          _
        $region32: #{tpu_custom_call.1} parent=11 // pred_fallthru
          _
        // Predicated region
        $region33: #{tpu_custom_call.1} parent=11 // pred_check
          %p248 = pneg %p172
        $region34: #{tpu_custom_call.1} parent=11 // pred_check_branch
          %250 = sbr.rel (%p248) target = $region36
        $region35: #{tpu_custom_call.1} parent=11 // pred_region
          _
        $region36: #{tpu_custom_call.1} parent=11 // pred_fallthru
          _
      $region12: #{tpu_custom_call.1} parent=5 // pred_fallthru
        _
      %p251 = scmp.lt.s32.totalorder %s20, 2
      // Predicated region
      $region37: #{tpu_custom_call.1} parent=5 // pred_check
        %p252 = pneg %p251
      $region38: #{tpu_custom_call.1} parent=5 // pred_check_branch
        %254 = sbr.rel (%p252) target = $region40
      $region39: #{tpu_custom_call.1} parent=5 // pred_region
        // Predicated region
        $region41: #{tpu_custom_call.1} parent=39 // pred_check
          %p255 = pneg %p40
        $region42: #{tpu_custom_call.1} parent=39 // pred_check_branch
          %257 = sbr.rel (%p255) target = $region44
        $region43: #{tpu_custom_call.1} parent=39 // pred_region
          %s258 = sand.u32 %s30, 1
          %s259 = scalar_lea.sflag [#allocation3], %s258
          %s260 = sand.u32 %s30, 1
          %s261 = smul.addr %s260, 128
          %s262 = scalar_lea.vmem [#allocation2], %s261
          %s263 = smul.u32 8, %s20
          %s265 = ssub.s32 2048, 2048
          %266 = vsyncadd %s259, %s265
          %s267 = smul.addr %s263, 2
          %s268 = smul.addr %s267, 128
          %s269 = scalar_lea.hbm %s0, %s268
          %s270 = sshll.u32 %s262, 4
          %s271 = int_to_ptr.vmem [resolvable:$true] %s270
          %276 = dma.hbm_to_vmem [thread:$0]  %s269, 2048, %s271, %s259, 128, 128, 8
        $region44: #{tpu_custom_call.1} parent=39 // pred_fallthru
          _
      $region40: #{tpu_custom_call.1} parent=5 // pred_fallthru
        _
      %p277 = scmp.le.s32.totalorder 1, %s20
      %p278 = scmp.lt.s32.totalorder %s20, 3
      %p279 = pnand %p277, %p278
      %p280 = pneg %p279
      // Predicated region
      $region45: #{tpu_custom_call.1} parent=5 // pred_check
        _
      $region46: #{tpu_custom_call.1} parent=5 // pred_check_branch
        %282 = sbr.rel (%p279) target = $region48
      $region47: #{tpu_custom_call.1} parent=5 // pred_region
        %s283 = ssub.s32 %s20, 1
        %s284 = sand.u32 %s33, 1
        %s285 = scalar_lea.sflag [#allocation3], %s284
        %s286 = sand.u32 %s33, 1
        %s287 = smul.addr %s286, 128
        %s288 = scalar_lea.vmem [#allocation2], %s287
        // Predicated region
        $region49: #{tpu_custom_call.1} parent=47 // pred_check
          %p289 = pneg %p46
        $region50: #{tpu_custom_call.1} parent=47 // pred_check_branch
          %291 = sbr.rel (%p289) target = $region52
        $region51: #{tpu_custom_call.1} parent=47 // pred_region
          %292 = dma.done %s285, 2048
        $region52: #{tpu_custom_call.1} parent=47 // pred_fallthru
          _
        // Predicated region
        $region53: #{tpu_custom_call.1} parent=47 // pred_check
          %p293 = pneg %p67
        $region54: #{tpu_custom_call.1} parent=47 // pred_check_branch
          %295 = sbr.rel (%p293) target = $region56
        $region55: #{tpu_custom_call.1} parent=47 // pred_region
          %296 = dma.done [#allocation6], 3072
        $region56: #{tpu_custom_call.1} parent=47 // pred_fallthru
          _
        // Predicated region
        $region57: #{tpu_custom_call.1} parent=47 // pred_check
          %p297 = pneg %p109
        $region58: #{tpu_custom_call.1} parent=47 // pred_check_branch
          %299 = sbr.rel (%p297) target = $region60
        $region59: #{tpu_custom_call.1} parent=47 // pred_region
          %300 = dma.done [#allocation6], 3072
        $region60: #{tpu_custom_call.1} parent=47 // pred_fallthru
          _
        %s301 = sand.u32 %s33, 1
        %s302 = scalar_lea.sflag [#allocation3], %s301
        %s303 = sand.u32 %s33, 1
        %s304 = smul.addr %s303, 128
        %s305 = scalar_lea.vmem [#allocation2], %s304
        %p306 = pneg %p46
        %p307 = pneg %p43
        %p308 = pneg %p67
        %p309 = pneg %p64
        %p310 = pneg %p88
        %p311 = pneg %p85
        %p312 = pneg %p109
        %p313 = pneg %p106
        %p314 = pneg %p130
        %p315 = pneg %p127
        %p316 = pneg %p151
        %p317 = pneg %p148
        %p318 = pneg %p172
        %p319 = pneg %p169
        %p320 = pneg %p198
        %p321 = pneg %p195
        %s322 = sand.u32 %s185, 1
        %s323 = scalar_lea.sflag [#allocation4], %s322
        %s324 = sand.u32 %s185, 1
        %s325 = smul.addr %s324, 128
        %s326 = scalar_lea.vmem [#allocation8], %s325
        %s327 = smul.u32 8, %s25
        %s328 = smul.u32 8, %s25
        %v330 = vld [vmem:[%s2] sm:$0x1]
        %v331 = vld [vmem:[%s4] sm:$0x1]
        %v332 = vld [vmem:[%s5] sm:$0x1]
        %s333 = scalar_lea.vmem %s5, 1
        %v334 = vld [vmem:[%s333] sm:$0x1]
        %s335 = scalar_lea.vmem %s5, 2
        %v336 = vld [vmem:[%s335] sm:$0x1]
        %s337 = scalar_lea.vmem %s5, 3
        %v338 = vld [vmem:[%s337] sm:$0x1]
        %s339 = scalar_lea.vmem %s5, 4
        %v340 = vld [vmem:[%s339] sm:$0x1]
        %s341 = scalar_lea.vmem %s5, 5
        %v342 = vld [vmem:[%s341] sm:$0x1]
        %v343 = vld [vmem:[%s6] sm:$0x1]
        %s344 = scalar_lea.vmem %s6, 1
        %v345 = vld [vmem:[%s344] sm:$0x1]
        %s346 = scalar_lea.vmem %s6, 2
        %v347 = vld [vmem:[%s346] sm:$0x1]
        %s348 = scalar_lea.vmem %s6, 3
        %v349 = vld [vmem:[%s348] sm:$0x1]
        %v350 = vld [vmem:[%s288] sm:$0xff]
        %v351 = vld [vmem:[%s288 + $0x8] sm:$0xff]
        %v352 = vld [vmem:[%s288 + $0x10] sm:$0xff]
        %v353 = vld [vmem:[%s288 + $0x18] sm:$0xff]
        %v354 = vld [vmem:[%s288 + $0x20] sm:$0xff]
        %v355 = vld [vmem:[%s288 + $0x28] sm:$0xff]
        %v356 = vld [vmem:[%s288 + $0x30] sm:$0xff]
        %v357 = vld [vmem:[%s288 + $0x38] sm:$0xff]
        %v358 = vld [vmem:[%s288 + $0x40] sm:$0xff]
        %v359 = vld [vmem:[%s288 + $0x48] sm:$0xff]
        %v360 = vld [vmem:[%s288 + $0x50] sm:$0xff]
        %v361 = vld [vmem:[%s288 + $0x58] sm:$0xff]
        %v362 = vld [vmem:[%s288 + $0x60] sm:$0xff]
        %v363 = vld [vmem:[%s288 + $0x68] sm:$0xff]
        %v364 = vld [vmem:[%s288 + $0x70] sm:$0xff]
        %v365 = vld [vmem:[%s288 + $0x78] sm:$0xff]
        %vm382 = vcmask 1040384
        %v383 = vrot.slane %v350, 7
        %v384 = vrot.slane %v351, 7
        %v385 = vsel %vm382, %v383, %v384
        %v386 = vrot.slane %v352, 7
        %v387 = vrot.slane %v353, 7
        %v388 = vsel %vm382, %v386, %v387
        %v389 = vrot.slane %v354, 7
        %v390 = vrot.slane %v355, 7
        %v391 = vsel %vm382, %v389, %v390
        %v392 = vrot.slane %v356, 7
        %v393 = vrot.slane %v357, 7
        %v394 = vsel %vm382, %v392, %v393
        %v395 = vrot.slane %v358, 7
        %v396 = vrot.slane %v359, 7
        %v397 = vsel %vm382, %v395, %v396
        %v398 = vrot.slane %v360, 7
        %v399 = vrot.slane %v361, 7
        %v400 = vsel %vm382, %v398, %v399
        %v401 = vrot.slane %v362, 7
        %v402 = vrot.slane %v363, 7
        %v403 = vsel %vm382, %v401, %v402
        %v404 = vrot.slane %v364, 7
        %v405 = vrot.slane %v365, 7
        %v406 = vsel %vm382, %v404, %v405
        %v423 = vsel %vm382, 0.0, %v383
        %v424 = vsel %vm382, 0.0, %v386
        %v425 = vsel %vm382, 0.0, %v389
        %v426 = vsel %vm382, 0.0, %v392
        %v427 = vsel %vm382, 0.0, %v395
        %v428 = vsel %vm382, 0.0, %v398
        %v429 = vsel %vm382, 0.0, %v401
        %v430 = vsel %vm382, 0.0, %v404
        %vm431 = vcmask 1046528
        %v432 = vrot.slane %v350, 1
        %v433 = vrot.slane %v351, 1
        %v434 = vsel %vm431, %v432, %v433
        %v435 = vrot.slane %v352, 1
        %v436 = vrot.slane %v353, 1
        %v437 = vsel %vm431, %v435, %v436
        %v438 = vrot.slane %v354, 1
        %v439 = vrot.slane %v355, 1
        %v440 = vsel %vm431, %v438, %v439
        %v441 = vrot.slane %v356, 1
        %v442 = vrot.slane %v357, 1
        %v443 = vsel %vm431, %v441, %v442
        %v444 = vrot.slane %v358, 1
        %v445 = vrot.slane %v359, 1
        %v446 = vsel %vm431, %v444, %v445
        %v447 = vrot.slane %v360, 1
        %v448 = vrot.slane %v361, 1
        %v449 = vsel %vm431, %v447, %v448
        %v450 = vrot.slane %v362, 1
        %v451 = vrot.slane %v363, 1
        %v452 = vsel %vm431, %v450, %v451
        %v453 = vrot.slane %v364, 1
        %v454 = vrot.slane %v365, 1
        %v455 = vsel %vm431, %v453, %v454
        %v472 = vsel %vm431, %v433, 0.0
        %v473 = vsel %vm431, %v436, 0.0
        %v474 = vsel %vm431, %v439, 0.0
        %v475 = vsel %vm431, %v442, 0.0
        %v476 = vsel %vm431, %v445, 0.0
        %v477 = vsel %vm431, %v448, 0.0
        %v478 = vsel %vm431, %v451, 0.0
        %v479 = vsel %vm431, %v454, 0.0
        %v480 = vpack.c.bf16 %v385, %v423
        %v481 = vpack.c.bf16 %v351, %v350
        %v482 = vpack.c.bf16 %v472, %v434
        %v483 = vpack.c.bf16 %v388, %v424
        %v484 = vpack.c.bf16 %v353, %v352
        %v485 = vpack.c.bf16 %v473, %v437
        %v486 = vpack.c.bf16 %v391, %v425
        %v487 = vpack.c.bf16 %v355, %v354
        %v488 = vpack.c.bf16 %v474, %v440
        %v489 = vpack.c.bf16 %v394, %v426
        %v490 = vpack.c.bf16 %v357, %v356
        %v491 = vpack.c.bf16 %v475, %v443
        %v492 = vpack.c.bf16 %v397, %v427
        %v493 = vpack.c.bf16 %v359, %v358
        %v494 = vpack.c.bf16 %v476, %v446
        %v495 = vpack.c.bf16 %v400, %v428
        %v496 = vpack.c.bf16 %v361, %v360
        %v497 = vpack.c.bf16 %v477, %v449
        %v498 = vpack.c.bf16 %v403, %v429
        %v499 = vpack.c.bf16 %v363, %v362
        %v500 = vpack.c.bf16 %v478, %v452
        %v501 = vpack.c.bf16 %v406, %v430
        %v502 = vpack.c.bf16 %v365, %v364
        %v503 = vpack.c.bf16 %v479, %v455
        %v504 = vld [vmem:[#allocation5] sm:$0xf]
        %v505 = vld [vmem:[#allocation5 + $0x4] sm:$0xf]
        %v506 = vld [vmem:[#allocation5 + $0x8] sm:$0xf]
        %v507 = vld [vmem:[#allocation5 + $0xc] sm:$0xf]
        %v508 = vld [vmem:[#allocation5 + $0x10] sm:$0xf]
        %v509 = vld [vmem:[#allocation5 + $0x14] sm:$0xf]
        %v510 = vld [vmem:[#allocation5 + $0x18] sm:$0xf]
        %v511 = vld [vmem:[#allocation5 + $0x1c] sm:$0xf]
        %v512 = vld [vmem:[#allocation5 + $0x20] sm:$0xf]
        %v513 = vld [vmem:[#allocation5 + $0x24] sm:$0xf]
        %v514 = vld [vmem:[#allocation5 + $0x28] sm:$0xf]
        %v515 = vld [vmem:[#allocation5 + $0x2c] sm:$0xf]
        %v516 = vld [vmem:[#allocation5 + $0x30] sm:$0xf]
        %v517 = vld [vmem:[#allocation5 + $0x34] sm:$0xf]
        %v518 = vld [vmem:[#allocation5 + $0x38] sm:$0xf]
        %v519 = vld [vmem:[#allocation5 + $0x3c] sm:$0xf]
        %v520 = vld [vmem:[#allocation5 + $0x40] sm:$0xf]
        %v521 = vld [vmem:[#allocation5 + $0x44] sm:$0xf]
        %v522 = vld [vmem:[#allocation5 + $0x48] sm:$0xf]
        %v523 = vld [vmem:[#allocation5 + $0x4c] sm:$0xf]
        %v524 = vld [vmem:[#allocation5 + $0x50] sm:$0xf]
        %v525 = vld [vmem:[#allocation5 + $0x54] sm:$0xf]
        %v526 = vld [vmem:[#allocation5 + $0x58] sm:$0xf]
        %v527 = vld [vmem:[#allocation5 + $0x5c] sm:$0xf]
        %v528 = vld [vmem:[#allocation5 + $0x60] sm:$0xf]
        %v529 = vld [vmem:[#allocation5 + $0x64] sm:$0xf]
        %v530 = vld [vmem:[#allocation5 + $0x68] sm:$0xf]
        %v531 = vld [vmem:[#allocation5 + $0x6c] sm:$0xf]
        %v532 = vld [vmem:[#allocation5 + $0x70] sm:$0xf]
        %v533 = vld [vmem:[#allocation5 + $0x74] sm:$0xf]
        %v534 = vld [vmem:[#allocation5 + $0x78] sm:$0xf]
        %v535 = vld [vmem:[#allocation5 + $0x7c] sm:$0xf]
        %v536 = vld [vmem:[#allocation5 + $0x80] sm:$0xf]
        %v537 = vld [vmem:[#allocation5 + $0x84] sm:$0xf]
        %v538 = vld [vmem:[#allocation5 + $0x88] sm:$0xf]
        %v539 = vld [vmem:[#allocation5 + $0x8c] sm:$0xf]
        %v540 = vld [vmem:[#allocation5 + $0x90] sm:$0xf]
        %v541 = vld [vmem:[#allocation5 + $0x94] sm:$0xf]
        %v542 = vld [vmem:[#allocation5 + $0x98] sm:$0xf]
        %v543 = vld [vmem:[#allocation5 + $0x9c] sm:$0xf]
        %v544 = vld [vmem:[#allocation5 + $0xa0] sm:$0xf]
        %v545 = vld [vmem:[#allocation5 + $0xa4] sm:$0xf]
        %v546 = vld [vmem:[#allocation5 + $0xa8] sm:$0xf]
        %v547 = vld [vmem:[#allocation5 + $0xac] sm:$0xf]
        %v548 = vld [vmem:[#allocation5 + $0xb0] sm:$0xf]
        %v549 = vld [vmem:[#allocation5 + $0xb4] sm:$0xf]
        %v550 = vld [vmem:[#allocation5 + $0xb8] sm:$0xf]
        %v551 = vld [vmem:[#allocation5 + $0xbc] sm:$0xf]
        %v553 = vlaneseq
        %v554 = vshrl.u32 %v553, 7
        %v555 = vsub.s32 0, %v554
        %v556 = vrot.slane %v330, %v555
        %v606 = vunpack.c.l.b16 %v504
        %v607 = vunpack.c.l.b16 %v505
        %v608 = vunpack.c.l.b16 %v506
        %v609 = vunpack.c.l.b16 %v507
        %v610 = vunpack.c.l.b16 %v508
        %v611 = vunpack.c.l.b16 %v509
        %v612 = vunpack.c.l.b16 %v510
        %v613 = vunpack.c.l.b16 %v511
        %v614 = vunpack.c.l.b16 %v512
        %v615 = vunpack.c.l.b16 %v513
        %v616 = vunpack.c.l.b16 %v514
        %v617 = vunpack.c.l.b16 %v515
        %v618 = vunpack.c.l.b16 %v516
        %v619 = vunpack.c.l.b16 %v517
        %v620 = vunpack.c.l.b16 %v518
        %v621 = vunpack.c.l.b16 %v519
        %v622 = vunpack.c.l.b16 %v520
        %v623 = vunpack.c.l.b16 %v521
        %v624 = vunpack.c.l.b16 %v522
        %v625 = vunpack.c.l.b16 %v523
        %v626 = vunpack.c.l.b16 %v524
        %v627 = vunpack.c.l.b16 %v525
        %v628 = vunpack.c.l.b16 %v526
        %v629 = vunpack.c.l.b16 %v527
        %v630 = vunpack.c.l.b16 %v528
        %v631 = vunpack.c.l.b16 %v529
        %v632 = vunpack.c.l.b16 %v530
        %v633 = vunpack.c.l.b16 %v531
        %v634 = vunpack.c.l.b16 %v532
        %v635 = vunpack.c.l.b16 %v533
        %v636 = vunpack.c.l.b16 %v534
        %v637 = vunpack.c.l.b16 %v535
        %v638 = vunpack.c.l.b16 %v536
        %v639 = vunpack.c.l.b16 %v537
        %v640 = vunpack.c.l.b16 %v538
        %v641 = vunpack.c.l.b16 %v539
        %v642 = vunpack.c.l.b16 %v540
        %v643 = vunpack.c.l.b16 %v541
        %v644 = vunpack.c.l.b16 %v542
        %v645 = vunpack.c.l.b16 %v543
        %v646 = vunpack.c.l.b16 %v544
        %v647 = vunpack.c.l.b16 %v545
        %v648 = vunpack.c.l.b16 %v546
        %v649 = vunpack.c.l.b16 %v547
        %v650 = vunpack.c.l.b16 %v548
        %v651 = vunpack.c.l.b16 %v549
        %v652 = vunpack.c.l.b16 %v550
        %v653 = vunpack.c.l.b16 %v551
        %v654 = vpack.c.b16 %v607, %v606
        %v655 = vpack.c.b16 %v609, %v608
        %v656 = vpack.c.b16 %v611, %v610
        %v657 = vpack.c.b16 %v613, %v612
        %v658 = vpack.c.b16 %v615, %v614
        %v659 = vpack.c.b16 %v617, %v616
        %v660 = vpack.c.b16 %v619, %v618
        %v661 = vpack.c.b16 %v621, %v620
        %v662 = vpack.c.b16 %v623, %v622
        %v663 = vpack.c.b16 %v625, %v624
        %v664 = vpack.c.b16 %v627, %v626
        %v665 = vpack.c.b16 %v629, %v628
        %v666 = vpack.c.b16 %v631, %v630
        %v667 = vpack.c.b16 %v633, %v632
        %v668 = vpack.c.b16 %v635, %v634
        %v669 = vpack.c.b16 %v637, %v636
        %v670 = vpack.c.b16 %v639, %v638
        %v671 = vpack.c.b16 %v641, %v640
        %v672 = vpack.c.b16 %v643, %v642
        %v673 = vpack.c.b16 %v645, %v644
        %v674 = vpack.c.b16 %v647, %v646
        %v675 = vpack.c.b16 %v649, %v648
        %v676 = vpack.c.b16 %v651, %v650
        %v677 = vpack.c.b16 %v653, %v652
        %702 = vmatprep.subr.bf16.mxu0 0
        %703 = vmatpush1.bf16.msra.mxu0 %v654
        %704 = vmatprep.subr.bf16.mxu0 0
        %705 = vmatpush1.bf16.msra.mxu0 %v655
        %706 = vmatprep.subr.bf16.mxu0 0
        %707 = vmatpush1.bf16.msra.mxu0 %v656
        %708 = vmatprep.subr.bf16.mxu0 0
        %709 = vmatpush1.bf16.msra.mxu0 %v657
        %710 = vmatprep.subr.bf16.mxu0 0
        %711 = vmatpush1.bf16.msra.mxu0 %v658
        %712 = vmatprep.subr.bf16.mxu0 0
        %713 = vmatpush1.bf16.msra.mxu0 %v659
        %714 = vmatprep.subr.bf16.mxu0 0
        %715 = vmatpush1.bf16.msra.mxu0 %v660
        %716 = vmatprep.subr.bf16.mxu0 0
        %717 = vmatpush1.bf16.msra.mxu0 %v661
        %718 = vmatprep.subr.bf16.mxu0 0
        %719 = vmatpush1.bf16.msra.mxu0 %v662
        %720 = vmatprep.subr.bf16.mxu0 0
        %721 = vmatpush1.bf16.msra.mxu0 %v663
        %722 = vmatprep.subr.bf16.mxu0 0
        %723 = vmatpush1.bf16.msra.mxu0 %v664
        %724 = vmatprep.subr.bf16.mxu0 0
        %725 = vmatpush1.bf16.msra.mxu0 %v665
        %726 = vmatprep.subr.bf16.mxu0 0
        %727 = vmatpush1.bf16.msra.mxu0 %v666
        %728 = vmatprep.subr.bf16.mxu0 0
        %729 = vmatpush1.bf16.msra.mxu0 %v667
        %730 = vmatprep.subr.bf16.mxu0 0
        %731 = vmatpush1.bf16.msra.mxu0 %v668
        %732 = vmatprep.subr.bf16.mxu0 0
        %733 = vmatpush1.bf16.msra.mxu0 %v669
        %734 = vmatprep.mubr.bf16.mxu0 %v481
        %735 = vmatmul.mubr.bf16.gmra.mrb[0].mxu0 %v480
        %v736 = vpop.f32.mrb[0].mxu0
        %v737 = vadd.f32 %v556, %v736
        %v738 = vpop.f32.mrb[0].mxu0
        %v739 = vpop.f32.mrb[0].mxu0
        %v740 = vadd.f32 %v556, %v739
        %v741 = vpop.f32.mrb[0].mxu0
        %742 = vmatprep.mubr.bf16.mxu0 %v484
        %743 = vmatmul.mubr.bf16.gmra.mrb[0].mxu0 %v483
        %v744 = vpop.f32.mrb[0].mxu0
        %v745 = vadd.f32 %v556, %v744
        %v746 = vpop.f32.mrb[0].mxu0
        %v747 = vpop.f32.mrb[0].mxu0
        %v748 = vadd.f32 %v556, %v747
        %v749 = vpop.f32.mrb[0].mxu0
        %750 = vmatprep.mubr.bf16.mxu0 %v487
        %751 = vmatmul.mubr.bf16.gmra.mrb[0].mxu0 %v486
        %v752 = vpop.f32.mrb[0].mxu0
        %v753 = vadd.f32 %v556, %v752
        %v754 = vpop.f32.mrb[0].mxu0
        %v755 = vpop.f32.mrb[0].mxu0
        %v756 = vadd.f32 %v556, %v755
        %v757 = vpop.f32.mrb[0].mxu0
        %758 = vmatprep.mubr.bf16.mxu0 %v490
        %759 = vmatmul.mubr.bf16.gmra.mrb[0].mxu0 %v489
        %v760 = vpop.f32.mrb[0].mxu0
        %v761 = vadd.f32 %v556, %v760
        %v762 = vpop.f32.mrb[0].mxu0
        %v763 = vpop.f32.mrb[0].mxu0
        %v764 = vadd.f32 %v556, %v763
        %v765 = vpop.f32.mrb[0].mxu0
        %766 = vmatprep.mubr.bf16.mxu0 %v493
        %767 = vmatmul.mubr.bf16.gmra.mrb[0].mxu0 %v492
        %v768 = vpop.f32.mrb[0].mxu0
        %v769 = vadd.f32 %v556, %v768
        %v770 = vpop.f32.mrb[0].mxu0
        %v771 = vpop.f32.mrb[0].mxu0
        %v772 = vadd.f32 %v556, %v771
        %v773 = vpop.f32.mrb[0].mxu0
        %774 = vmatprep.mubr.bf16.mxu0 %v496
        %775 = vmatmul.mubr.bf16.gmra.mrb[0].mxu0 %v495
        %v776 = vpop.f32.mrb[0].mxu0
        %v777 = vadd.f32 %v556, %v776
        %v778 = vpop.f32.mrb[0].mxu0
        %v779 = vpop.f32.mrb[0].mxu0
        %v780 = vadd.f32 %v556, %v779
        %v781 = vpop.f32.mrb[0].mxu0
        %782 = vmatprep.mubr.bf16.mxu0 %v499
        %783 = vmatmul.mubr.bf16.gmra.mrb[0].mxu0 %v498
        %v784 = vpop.f32.mrb[0].mxu0
        %v785 = vadd.f32 %v556, %v784
        %v786 = vpop.f32.mrb[0].mxu0
        %v787 = vpop.f32.mrb[0].mxu0
        %v788 = vadd.f32 %v556, %v787
        %v789 = vpop.f32.mrb[0].mxu0
        %790 = vmatprep.mubr.bf16.mxu0 %v502
        %791 = vmatmul.mubr.bf16.gmra.mrb[0].mxu0 %v501
        %v792 = vpop.f32.mrb[0].mxu0
        %v793 = vadd.f32 %v556, %v792
        %v794 = vpop.f32.mrb[0].mxu0
        %v795 = vpop.f32.mrb[0].mxu0
        %v796 = vadd.f32 %v556, %v795
        %v797 = vpop.f32.mrb[0].mxu0
        %798 = vdwg.mxu0
        %799 = vmatprep.subr.bf16.mxu0 0
        %800 = vmatpush1.bf16.msra.mxu0 %v670
        %801 = vmatprep.subr.bf16.mxu0 0
        %802 = vmatpush1.bf16.msra.mxu0 %v671
        %803 = vmatprep.subr.bf16.mxu0 0
        %804 = vmatpush1.bf16.msra.mxu0 %v672
        %805 = vmatprep.subr.bf16.mxu0 0
        %806 = vmatpush1.bf16.msra.mxu0 %v673
        %807 = vmatprep.subr.bf16.mxu0 0
        %808 = vmatpush1.bf16.msra.mxu0 %v674
        %809 = vmatprep.subr.bf16.mxu0 0
        %810 = vmatpush1.bf16.msra.mxu0 %v675
        %811 = vmatprep.subr.bf16.mxu0 0
        %812 = vmatpush1.bf16.msra.mxu0 %v676
        %813 = vmatprep.subr.bf16.mxu0 0
        %814 = vmatpush1.bf16.msra.mxu0 %v677
        %815 = vmatprep.subr.bf16.mxu0 0
        %816 = vmatpush1.bf16.msra.mxu0 0
        %817 = vmatprep.subr.bf16.mxu0 0
        %818 = vmatpush1.bf16.msra.mxu0 0
        %819 = vmatprep.subr.bf16.mxu0 0
        %820 = vmatpush1.bf16.msra.mxu0 0
        %821 = vmatprep.subr.bf16.mxu0 0
        %822 = vmatpush1.bf16.msra.mxu0 0
        %823 = vmatprep.subr.bf16.mxu0 0
        %824 = vmatpush1.bf16.msra.mxu0 0
        %825 = vmatprep.subr.bf16.mxu0 0
        %826 = vmatpush1.bf16.msra.mxu0 0
        %827 = vmatprep.subr.bf16.mxu0 0
        %828 = vmatpush1.bf16.msra.mxu0 0
        %829 = vmatprep.subr.bf16.mxu0 0
        %830 = vmatpush1.bf16.msra.mxu0 0
        %831 = vmatprep.mubr.bf16.mxu0 0
        %832 = vmatmul.mubr.bf16.gmra.mrb[0].mxu0 %v482
        %v833 = vpop.f32.mrb[0].mxu0
        %v834 = vadd.f32 %v737, %v833
        %v835 = vpop.f32.mrb[0].mxu0
        %v836 = vpop.f32.mrb[0].mxu0
        %v837 = vadd.f32 %v740, %v836
        %v838 = vpop.f32.mrb[0].mxu0
        %839 = vmatprep.mubr.bf16.mxu0 0
        %840 = vmatmul.mubr.bf16.gmra.mrb[0].mxu0 %v485
        %v841 = vpop.f32.mrb[0].mxu0
        %v842 = vadd.f32 %v745, %v841
        %v843 = vpop.f32.mrb[0].mxu0
        %v844 = vpop.f32.mrb[0].mxu0
        %v845 = vadd.f32 %v748, %v844
        %v846 = vpop.f32.mrb[0].mxu0
        %847 = vmatprep.mubr.bf16.mxu0 0
        %848 = vmatmul.mubr.bf16.gmra.mrb[0].mxu0 %v488
        %v849 = vpop.f32.mrb[0].mxu0
        %v850 = vadd.f32 %v753, %v849
        %v851 = vpop.f32.mrb[0].mxu0
        %v852 = vpop.f32.mrb[0].mxu0
        %v853 = vadd.f32 %v756, %v852
        %v854 = vpop.f32.mrb[0].mxu0
        %855 = vmatprep.mubr.bf16.mxu0 0
        %856 = vmatmul.mubr.bf16.gmra.mrb[0].mxu0 %v491
        %v857 = vpop.f32.mrb[0].mxu0
        %v858 = vadd.f32 %v761, %v857
        %v859 = vpop.f32.mrb[0].mxu0
        %v860 = vpop.f32.mrb[0].mxu0
        %v861 = vadd.f32 %v764, %v860
        %v862 = vpop.f32.mrb[0].mxu0
        %863 = vmatprep.mubr.bf16.mxu0 0
        %864 = vmatmul.mubr.bf16.gmra.mrb[0].mxu0 %v494
        %v865 = vpop.f32.mrb[0].mxu0
        %v866 = vadd.f32 %v769, %v865
        %v867 = vpop.f32.mrb[0].mxu0
        %v868 = vpop.f32.mrb[0].mxu0
        %v869 = vadd.f32 %v772, %v868
        %v870 = vpop.f32.mrb[0].mxu0
        %871 = vmatprep.mubr.bf16.mxu0 0
        %872 = vmatmul.mubr.bf16.gmra.mrb[0].mxu0 %v497
        %v873 = vpop.f32.mrb[0].mxu0
        %v874 = vadd.f32 %v777, %v873
        %v875 = vpop.f32.mrb[0].mxu0
        %v876 = vpop.f32.mrb[0].mxu0
        %v877 = vadd.f32 %v780, %v876
        %v878 = vpop.f32.mrb[0].mxu0
        %879 = vmatprep.mubr.bf16.mxu0 0
        %880 = vmatmul.mubr.bf16.gmra.mrb[0].mxu0 %v500
        %v881 = vpop.f32.mrb[0].mxu0
        %v882 = vadd.f32 %v785, %v881
        %v883 = vpop.f32.mrb[0].mxu0
        %v884 = vpop.f32.mrb[0].mxu0
        %v885 = vadd.f32 %v788, %v884
        %v886 = vpop.f32.mrb[0].mxu0
        %887 = vmatprep.mubr.bf16.mxu0 0
        %888 = vmatmul.mubr.bf16.gmra.mrb[0].mxu0 %v503
        %v889 = vpop.f32.mrb[0].mxu0
        %v890 = vadd.f32 %v793, %v889
        %v891 = vpop.f32.mrb[0].mxu0
        %v892 = vpop.f32.mrb[0].mxu0
        %v893 = vadd.f32 %v796, %v892
        %v894 = vpop.f32.mrb[0].mxu0
        %895 = vdwg.mxu0
        %v897 = vlaneseq
        %v898 = vshrl.u32 %v897, 7
        %v899 = vsub.s32 0, %v898
        %v900 = vrot.slane %v342, %v899
        %v902 = vmul.f32 %v900, %v834
        %v903 = vmul.f32 %v900, %v837
        %v904 = vmul.f32 %v900, %v842
        %v905 = vmul.f32 %v900, %v845
        %v906 = vmul.f32 %v900, %v850
        %v907 = vmul.f32 %v900, %v853
        %v908 = vmul.f32 %v900, %v858
        %v909 = vmul.f32 %v900, %v861
        %v910 = vmul.f32 %v900, %v866
        %v911 = vmul.f32 %v900, %v869
        %v912 = vmul.f32 %v900, %v874
        %v913 = vmul.f32 %v900, %v877
        %v914 = vmul.f32 %v900, %v882
        %v915 = vmul.f32 %v900, %v885
        %v916 = vmul.f32 %v900, %v890
        %v917 = vmul.f32 %v900, %v893
        %v919 = vlaneseq
        %v920 = vshrl.u32 %v919, 7
        %v921 = vsub.s32 0, %v920
        %v922 = vrot.slane %v340, %v921
        %v924 = vadd.f32 %v902, %v922
        %v925 = vadd.f32 %v903, %v922
        %v926 = vadd.f32 %v904, %v922
        %v927 = vadd.f32 %v905, %v922
        %v928 = vadd.f32 %v906, %v922
        %v929 = vadd.f32 %v907, %v922
        %v930 = vadd.f32 %v908, %v922
        %v931 = vadd.f32 %v909, %v922
        %v932 = vadd.f32 %v910, %v922
        %v933 = vadd.f32 %v911, %v922
        %v934 = vadd.f32 %v912, %v922
        %v935 = vadd.f32 %v913, %v922
        %v936 = vadd.f32 %v914, %v922
        %v937 = vadd.f32 %v915, %v922
        %v938 = vadd.f32 %v916, %v922
        %v939 = vadd.f32 %v917, %v922
        %v940 = vmul.f32 %v924, %v834
        %v941 = vmul.f32 %v925, %v837
        %v942 = vmul.f32 %v926, %v842
        %v943 = vmul.f32 %v927, %v845
        %v944 = vmul.f32 %v928, %v850
        %v945 = vmul.f32 %v929, %v853
        %v946 = vmul.f32 %v930, %v858
        %v947 = vmul.f32 %v931, %v861
        %v948 = vmul.f32 %v932, %v866
        %v949 = vmul.f32 %v933, %v869
        %v950 = vmul.f32 %v934, %v874
        %v951 = vmul.f32 %v935, %v877
        %v952 = vmul.f32 %v936, %v882
        %v953 = vmul.f32 %v937, %v885
        %v954 = vmul.f32 %v938, %v890
        %v955 = vmul.f32 %v939, %v893
        %v957 = vlaneseq
        %v958 = vshrl.u32 %v957, 7
        %v959 = vsub.s32 0, %v958
        %v960 = vrot.slane %v338, %v959
        %v962 = vadd.f32 %v940, %v960
        %v963 = vadd.f32 %v941, %v960
        %v964 = vadd.f32 %v942, %v960
        %v965 = vadd.f32 %v943, %v960
        %v966 = vadd.f32 %v944, %v960
        %v967 = vadd.f32 %v945, %v960
        %v968 = vadd.f32 %v946, %v960
        %v969 = vadd.f32 %v947, %v960
        %v970 = vadd.f32 %v948, %v960
        %v971 = vadd.f32 %v949, %v960
        %v972 = vadd.f32 %v950, %v960
        %v973 = vadd.f32 %v951, %v960
        %v974 = vadd.f32 %v952, %v960
        %v975 = vadd.f32 %v953, %v960
        %v976 = vadd.f32 %v954, %v960
        %v977 = vadd.f32 %v955, %v960
        %v978 = vmul.f32 %v962, %v834
        %v979 = vmul.f32 %v963, %v837
        %v980 = vmul.f32 %v964, %v842
        %v981 = vmul.f32 %v965, %v845
        %v982 = vmul.f32 %v966, %v850
        %v983 = vmul.f32 %v967, %v853
        %v984 = vmul.f32 %v968, %v858
        %v985 = vmul.f32 %v969, %v861
        %v986 = vmul.f32 %v970, %v866
        %v987 = vmul.f32 %v971, %v869
        %v988 = vmul.f32 %v972, %v874
        %v989 = vmul.f32 %v973, %v877
        %v990 = vmul.f32 %v974, %v882
        %v991 = vmul.f32 %v975, %v885
        %v992 = vmul.f32 %v976, %v890
        %v993 = vmul.f32 %v977, %v893
        %v995 = vlaneseq
        %v996 = vshrl.u32 %v995, 7
        %v997 = vsub.s32 0, %v996
        %v998 = vrot.slane %v336, %v997
        %v1000 = vadd.f32 %v978, %v998
        %v1001 = vadd.f32 %v979, %v998
        %v1002 = vadd.f32 %v980, %v998
        %v1003 = vadd.f32 %v981, %v998
        %v1004 = vadd.f32 %v982, %v998
        %v1005 = vadd.f32 %v983, %v998
        %v1006 = vadd.f32 %v984, %v998
        %v1007 = vadd.f32 %v985, %v998
        %v1008 = vadd.f32 %v986, %v998
        %v1009 = vadd.f32 %v987, %v998
        %v1010 = vadd.f32 %v988, %v998
        %v1011 = vadd.f32 %v989, %v998
        %v1012 = vadd.f32 %v990, %v998
        %v1013 = vadd.f32 %v991, %v998
        %v1014 = vadd.f32 %v992, %v998
        %v1015 = vadd.f32 %v993, %v998
        %v1016 = vmul.f32 %v1000, %v834
        %v1017 = vmul.f32 %v1001, %v837
        %v1018 = vmul.f32 %v1002, %v842
        %v1019 = vmul.f32 %v1003, %v845
        %v1020 = vmul.f32 %v1004, %v850
        %v1021 = vmul.f32 %v1005, %v853
        %v1022 = vmul.f32 %v1006, %v858
        %v1023 = vmul.f32 %v1007, %v861
        %v1024 = vmul.f32 %v1008, %v866
        %v1025 = vmul.f32 %v1009, %v869
        %v1026 = vmul.f32 %v1010, %v874
        %v1027 = vmul.f32 %v1011, %v877
        %v1028 = vmul.f32 %v1012, %v882
        %v1029 = vmul.f32 %v1013, %v885
        %v1030 = vmul.f32 %v1014, %v890
        %v1031 = vmul.f32 %v1015, %v893
        %v1033 = vlaneseq
        %v1034 = vshrl.u32 %v1033, 7
        %v1035 = vsub.s32 0, %v1034
        %v1036 = vrot.slane %v334, %v1035
        %v1038 = vadd.f32 %v1016, %v1036
        %v1039 = vadd.f32 %v1017, %v1036
        %v1040 = vadd.f32 %v1018, %v1036
        %v1041 = vadd.f32 %v1019, %v1036
        %v1042 = vadd.f32 %v1020, %v1036
        %v1043 = vadd.f32 %v1021, %v1036
        %v1044 = vadd.f32 %v1022, %v1036
        %v1045 = vadd.f32 %v1023, %v1036
        %v1046 = vadd.f32 %v1024, %v1036
        %v1047 = vadd.f32 %v1025, %v1036
        %v1048 = vadd.f32 %v1026, %v1036
        %v1049 = vadd.f32 %v1027, %v1036
        %v1050 = vadd.f32 %v1028, %v1036
        %v1051 = vadd.f32 %v1029, %v1036
        %v1052 = vadd.f32 %v1030, %v1036
        %v1053 = vadd.f32 %v1031, %v1036
        %v1054 = vmul.f32 %v1038, %v834
        %v1055 = vmul.f32 %v1039, %v837
        %v1056 = vmul.f32 %v1040, %v842
        %v1057 = vmul.f32 %v1041, %v845
        %v1058 = vmul.f32 %v1042, %v850
        %v1059 = vmul.f32 %v1043, %v853
        %v1060 = vmul.f32 %v1044, %v858
        %v1061 = vmul.f32 %v1045, %v861
        %v1062 = vmul.f32 %v1046, %v866
        %v1063 = vmul.f32 %v1047, %v869
        %v1064 = vmul.f32 %v1048, %v874
        %v1065 = vmul.f32 %v1049, %v877
        %v1066 = vmul.f32 %v1050, %v882
        %v1067 = vmul.f32 %v1051, %v885
        %v1068 = vmul.f32 %v1052, %v890
        %v1069 = vmul.f32 %v1053, %v893
        %v1071 = vlaneseq
        %v1072 = vshrl.u32 %v1071, 7
        %v1073 = vsub.s32 0, %v1072
        %v1074 = vrot.slane %v332, %v1073
        %v1076 = vadd.f32 %v1054, %v1074
        %v1077 = vadd.f32 %v1055, %v1074
        %v1078 = vadd.f32 %v1056, %v1074
        %v1079 = vadd.f32 %v1057, %v1074
        %v1080 = vadd.f32 %v1058, %v1074
        %v1081 = vadd.f32 %v1059, %v1074
        %v1082 = vadd.f32 %v1060, %v1074
        %v1083 = vadd.f32 %v1061, %v1074
        %v1084 = vadd.f32 %v1062, %v1074
        %v1085 = vadd.f32 %v1063, %v1074
        %v1086 = vadd.f32 %v1064, %v1074
        %v1087 = vadd.f32 %v1065, %v1074
        %v1088 = vadd.f32 %v1066, %v1074
        %v1089 = vadd.f32 %v1067, %v1074
        %v1090 = vadd.f32 %v1068, %v1074
        %v1091 = vadd.f32 %v1069, %v1074
        %v1093 = vlaneseq
        %v1094 = vshrl.u32 %v1093, 7
        %v1095 = vsub.s32 0, %v1094
        %v1096 = vrot.slane %v349, %v1095
        %v1098 = vmul.f32 %v1096, %v834
        %v1099 = vmul.f32 %v1096, %v837
        %v1100 = vmul.f32 %v1096, %v842
        %v1101 = vmul.f32 %v1096, %v845
        %v1102 = vmul.f32 %v1096, %v850
        %v1103 = vmul.f32 %v1096, %v853
        %v1104 = vmul.f32 %v1096, %v858
        %v1105 = vmul.f32 %v1096, %v861
        %v1106 = vmul.f32 %v1096, %v866
        %v1107 = vmul.f32 %v1096, %v869
        %v1108 = vmul.f32 %v1096, %v874
        %v1109 = vmul.f32 %v1096, %v877
        %v1110 = vmul.f32 %v1096, %v882
        %v1111 = vmul.f32 %v1096, %v885
        %v1112 = vmul.f32 %v1096, %v890
        %v1113 = vmul.f32 %v1096, %v893
        %v1115 = vlaneseq
        %v1116 = vshrl.u32 %v1115, 7
        %v1117 = vsub.s32 0, %v1116
        %v1118 = vrot.slane %v347, %v1117
        %v1120 = vadd.f32 %v1098, %v1118
        %v1121 = vadd.f32 %v1099, %v1118
        %v1122 = vadd.f32 %v1100, %v1118
        %v1123 = vadd.f32 %v1101, %v1118
        %v1124 = vadd.f32 %v1102, %v1118
        %v1125 = vadd.f32 %v1103, %v1118
        %v1126 = vadd.f32 %v1104, %v1118
        %v1127 = vadd.f32 %v1105, %v1118
        %v1128 = vadd.f32 %v1106, %v1118
        %v1129 = vadd.f32 %v1107, %v1118
        %v1130 = vadd.f32 %v1108, %v1118
        %v1131 = vadd.f32 %v1109, %v1118
        %v1132 = vadd.f32 %v1110, %v1118
        %v1133 = vadd.f32 %v1111, %v1118
        %v1134 = vadd.f32 %v1112, %v1118
        %v1135 = vadd.f32 %v1113, %v1118
        %v1136 = vmul.f32 %v1120, %v834
        %v1137 = vmul.f32 %v1121, %v837
        %v1138 = vmul.f32 %v1122, %v842
        %v1139 = vmul.f32 %v1123, %v845
        %v1140 = vmul.f32 %v1124, %v850
        %v1141 = vmul.f32 %v1125, %v853
        %v1142 = vmul.f32 %v1126, %v858
        %v1143 = vmul.f32 %v1127, %v861
        %v1144 = vmul.f32 %v1128, %v866
        %v1145 = vmul.f32 %v1129, %v869
        %v1146 = vmul.f32 %v1130, %v874
        %v1147 = vmul.f32 %v1131, %v877
        %v1148 = vmul.f32 %v1132, %v882
        %v1149 = vmul.f32 %v1133, %v885
        %v1150 = vmul.f32 %v1134, %v890
        %v1151 = vmul.f32 %v1135, %v893
        %v1153 = vlaneseq
        %v1154 = vshrl.u32 %v1153, 7
        %v1155 = vsub.s32 0, %v1154
        %v1156 = vrot.slane %v345, %v1155
        %v1158 = vadd.f32 %v1136, %v1156
        %v1159 = vadd.f32 %v1137, %v1156
        %v1160 = vadd.f32 %v1138, %v1156
        %v1161 = vadd.f32 %v1139, %v1156
        %v1162 = vadd.f32 %v1140, %v1156
        %v1163 = vadd.f32 %v1141, %v1156
        %v1164 = vadd.f32 %v1142, %v1156
        %v1165 = vadd.f32 %v1143, %v1156
        %v1166 = vadd.f32 %v1144, %v1156
        %v1167 = vadd.f32 %v1145, %v1156
        %v1168 = vadd.f32 %v1146, %v1156
        %v1169 = vadd.f32 %v1147, %v1156
        %v1170 = vadd.f32 %v1148, %v1156
        %v1171 = vadd.f32 %v1149, %v1156
        %v1172 = vadd.f32 %v1150, %v1156
        %v1173 = vadd.f32 %v1151, %v1156
        %v1174 = vmul.f32 %v1158, %v834
        %v1175 = vmul.f32 %v1159, %v837
        %v1176 = vmul.f32 %v1160, %v842
        %v1177 = vmul.f32 %v1161, %v845
        %v1178 = vmul.f32 %v1162, %v850
        %v1179 = vmul.f32 %v1163, %v853
        %v1180 = vmul.f32 %v1164, %v858
        %v1181 = vmul.f32 %v1165, %v861
        %v1182 = vmul.f32 %v1166, %v866
        %v1183 = vmul.f32 %v1167, %v869
        %v1184 = vmul.f32 %v1168, %v874
        %v1185 = vmul.f32 %v1169, %v877
        %v1186 = vmul.f32 %v1170, %v882
        %v1187 = vmul.f32 %v1171, %v885
        %v1188 = vmul.f32 %v1172, %v890
        %v1189 = vmul.f32 %v1173, %v893
        %v1191 = vlaneseq
        %v1192 = vshrl.u32 %v1191, 7
        %v1193 = vsub.s32 0, %v1192
        %v1194 = vrot.slane %v343, %v1193
        %v1196 = vadd.f32 %v1174, %v1194
        %v1197 = vadd.f32 %v1175, %v1194
        %v1198 = vadd.f32 %v1176, %v1194
        %v1199 = vadd.f32 %v1177, %v1194
        %v1200 = vadd.f32 %v1178, %v1194
        %v1201 = vadd.f32 %v1179, %v1194
        %v1202 = vadd.f32 %v1180, %v1194
        %v1203 = vadd.f32 %v1181, %v1194
        %v1204 = vadd.f32 %v1182, %v1194
        %v1205 = vadd.f32 %v1183, %v1194
        %v1206 = vadd.f32 %v1184, %v1194
        %v1207 = vadd.f32 %v1185, %v1194
        %v1208 = vadd.f32 %v1186, %v1194
        %v1209 = vadd.f32 %v1187, %v1194
        %v1210 = vadd.f32 %v1188, %v1194
        %v1211 = vadd.f32 %v1189, %v1194
        %v1212 = vmul.f32 %v1196, %v834
        %v1213 = vmul.f32 %v1197, %v837
        %v1214 = vmul.f32 %v1198, %v842
        %v1215 = vmul.f32 %v1199, %v845
        %v1216 = vmul.f32 %v1200, %v850
        %v1217 = vmul.f32 %v1201, %v853
        %v1218 = vmul.f32 %v1202, %v858
        %v1219 = vmul.f32 %v1203, %v861
        %v1220 = vmul.f32 %v1204, %v866
        %v1221 = vmul.f32 %v1205, %v869
        %v1222 = vmul.f32 %v1206, %v874
        %v1223 = vmul.f32 %v1207, %v877
        %v1224 = vmul.f32 %v1208, %v882
        %v1225 = vmul.f32 %v1209, %v885
        %v1226 = vmul.f32 %v1210, %v890
        %v1227 = vmul.f32 %v1211, %v893
        %v1228 = vand.u32 2147483647, %v1212
        %v1229 = vand.u32 2147483647, %v1213
        %v1230 = vand.u32 2147483647, %v1214
        %v1231 = vand.u32 2147483647, %v1215
        %v1232 = vand.u32 2147483647, %v1216
        %v1233 = vand.u32 2147483647, %v1217
        %v1234 = vand.u32 2147483647, %v1218
        %v1235 = vand.u32 2147483647, %v1219
        %v1236 = vand.u32 2147483647, %v1220
        %v1237 = vand.u32 2147483647, %v1221
        %v1238 = vand.u32 2147483647, %v1222
        %v1239 = vand.u32 2147483647, %v1223
        %v1240 = vand.u32 2147483647, %v1224
        %v1241 = vand.u32 2147483647, %v1225
        %v1242 = vand.u32 2147483647, %v1226
        %v1243 = vand.u32 2147483647, %v1227
        %v1244 = vadd.f32 %v1228, 1.0
        %v1245 = vadd.f32 %v1229, 1.0
        %v1246 = vadd.f32 %v1230, 1.0
        %v1247 = vadd.f32 %v1231, 1.0
        %v1248 = vadd.f32 %v1232, 1.0
        %v1249 = vadd.f32 %v1233, 1.0
        %v1250 = vadd.f32 %v1234, 1.0
        %v1251 = vadd.f32 %v1235, 1.0
        %v1252 = vadd.f32 %v1236, 1.0
        %v1253 = vadd.f32 %v1237, 1.0
        %v1254 = vadd.f32 %v1238, 1.0
        %v1255 = vadd.f32 %v1239, 1.0
        %v1256 = vadd.f32 %v1240, 1.0
        %v1257 = vadd.f32 %v1241, 1.0
        %v1258 = vadd.f32 %v1242, 1.0
        %v1259 = vadd.f32 %v1243, 1.0
        %v1260 = vrcp.pop %v1244
        %v1261 = vrcp.pop %v1245
        %v1262 = vrcp.pop %v1246
        %v1263 = vrcp.pop %v1247
        %v1264 = vrcp.pop %v1248
        %v1265 = vrcp.pop %v1249
        %v1266 = vrcp.pop %v1250
        %v1267 = vrcp.pop %v1251
        %v1268 = vrcp.pop %v1252
        %v1269 = vrcp.pop %v1253
        %v1270 = vrcp.pop %v1254
        %v1271 = vrcp.pop %v1255
        %v1272 = vrcp.pop %v1256
        %v1273 = vrcp.pop %v1257
        %v1274 = vrcp.pop %v1258
        %v1275 = vrcp.pop %v1259
        %v1276 = vmul.f32 %v1244, %v1260
        %v1277 = vmul.f32 %v1245, %v1261
        %v1278 = vmul.f32 %v1246, %v1262
        %v1279 = vmul.f32 %v1247, %v1263
        %v1280 = vmul.f32 %v1248, %v1264
        %v1281 = vmul.f32 %v1249, %v1265
        %v1282 = vmul.f32 %v1250, %v1266
        %v1283 = vmul.f32 %v1251, %v1267
        %v1284 = vmul.f32 %v1252, %v1268
        %v1285 = vmul.f32 %v1253, %v1269
        %v1286 = vmul.f32 %v1254, %v1270
        %v1287 = vmul.f32 %v1255, %v1271
        %v1288 = vmul.f32 %v1256, %v1272
        %v1289 = vmul.f32 %v1257, %v1273
        %v1290 = vmul.f32 %v1258, %v1274
        %v1291 = vmul.f32 %v1259, %v1275
        %v1292 = vsub.f32 2.0, %v1276
        %v1293 = vsub.f32 2.0, %v1277
        %v1294 = vsub.f32 2.0, %v1278
        %v1295 = vsub.f32 2.0, %v1279
        %v1296 = vsub.f32 2.0, %v1280
        %v1297 = vsub.f32 2.0, %v1281
        %v1298 = vsub.f32 2.0, %v1282
        %v1299 = vsub.f32 2.0, %v1283
        %v1300 = vsub.f32 2.0, %v1284
        %v1301 = vsub.f32 2.0, %v1285
        %v1302 = vsub.f32 2.0, %v1286
        %v1303 = vsub.f32 2.0, %v1287
        %v1304 = vsub.f32 2.0, %v1288
        %v1305 = vsub.f32 2.0, %v1289
        %v1306 = vsub.f32 2.0, %v1290
        %v1307 = vsub.f32 2.0, %v1291
        %v1308 = vmul.f32 %v1260, %v1292
        %v1309 = vmul.f32 %v1261, %v1293
        %v1310 = vmul.f32 %v1262, %v1294
        %v1311 = vmul.f32 %v1263, %v1295
        %v1312 = vmul.f32 %v1264, %v1296
        %v1313 = vmul.f32 %v1265, %v1297
        %v1314 = vmul.f32 %v1266, %v1298
        %v1315 = vmul.f32 %v1267, %v1299
        %v1316 = vmul.f32 %v1268, %v1300
        %v1317 = vmul.f32 %v1269, %v1301
        %v1318 = vmul.f32 %v1270, %v1302
        %v1319 = vmul.f32 %v1271, %v1303
        %v1320 = vmul.f32 %v1272, %v1304
        %v1321 = vmul.f32 %v1273, %v1305
        %v1322 = vmul.f32 %v1274, %v1306
        %v1323 = vmul.f32 %v1275, %v1307
        %v1324 = vmul.f32 %v1076, %v1308
        %v1325 = vmul.f32 %v1077, %v1309
        %v1326 = vmul.f32 %v1078, %v1310
        %v1327 = vmul.f32 %v1079, %v1311
        %v1328 = vmul.f32 %v1080, %v1312
        %v1329 = vmul.f32 %v1081, %v1313
        %v1330 = vmul.f32 %v1082, %v1314
        %v1331 = vmul.f32 %v1083, %v1315
        %v1332 = vmul.f32 %v1084, %v1316
        %v1333 = vmul.f32 %v1085, %v1317
        %v1334 = vmul.f32 %v1086, %v1318
        %v1335 = vmul.f32 %v1087, %v1319
        %v1336 = vmul.f32 %v1088, %v1320
        %v1337 = vmul.f32 %v1089, %v1321
        %v1338 = vmul.f32 %v1090, %v1322
        %v1339 = vmul.f32 %v1091, %v1323
        %v1356 = vrot.slane %v1324, 7
        %v1357 = vrot.slane %v1325, 7
        %v1358 = vsel %vm382, %v1356, %v1357
        %v1359 = vrot.slane %v1326, 7
        %v1360 = vrot.slane %v1327, 7
        %v1361 = vsel %vm382, %v1359, %v1360
        %v1362 = vrot.slane %v1328, 7
        %v1363 = vrot.slane %v1329, 7
        %v1364 = vsel %vm382, %v1362, %v1363
        %v1365 = vrot.slane %v1330, 7
        %v1366 = vrot.slane %v1331, 7
        %v1367 = vsel %vm382, %v1365, %v1366
        %v1368 = vrot.slane %v1332, 7
        %v1369 = vrot.slane %v1333, 7
        %v1370 = vsel %vm382, %v1368, %v1369
        %v1371 = vrot.slane %v1334, 7
        %v1372 = vrot.slane %v1335, 7
        %v1373 = vsel %vm382, %v1371, %v1372
        %v1374 = vrot.slane %v1336, 7
        %v1375 = vrot.slane %v1337, 7
        %v1376 = vsel %vm382, %v1374, %v1375
        %v1377 = vrot.slane %v1338, 7
        %v1378 = vrot.slane %v1339, 7
        %v1379 = vsel %vm382, %v1377, %v1378
        %v1396 = vsel %vm382, 0.0, %v1356
        %v1397 = vsel %vm382, 0.0, %v1359
        %v1398 = vsel %vm382, 0.0, %v1362
        %v1399 = vsel %vm382, 0.0, %v1365
        %v1400 = vsel %vm382, 0.0, %v1368
        %v1401 = vsel %vm382, 0.0, %v1371
        %v1402 = vsel %vm382, 0.0, %v1374
        %v1403 = vsel %vm382, 0.0, %v1377
        %v1404 = vrot.slane %v1324, 1
        %v1405 = vrot.slane %v1325, 1
        %v1406 = vsel %vm431, %v1404, %v1405
        %v1407 = vrot.slane %v1326, 1
        %v1408 = vrot.slane %v1327, 1
        %v1409 = vsel %vm431, %v1407, %v1408
        %v1410 = vrot.slane %v1328, 1
        %v1411 = vrot.slane %v1329, 1
        %v1412 = vsel %vm431, %v1410, %v1411
        %v1413 = vrot.slane %v1330, 1
        %v1414 = vrot.slane %v1331, 1
        %v1415 = vsel %vm431, %v1413, %v1414
        %v1416 = vrot.slane %v1332, 1
        %v1417 = vrot.slane %v1333, 1
        %v1418 = vsel %vm431, %v1416, %v1417
        %v1419 = vrot.slane %v1334, 1
        %v1420 = vrot.slane %v1335, 1
        %v1421 = vsel %vm431, %v1419, %v1420
        %v1422 = vrot.slane %v1336, 1
        %v1423 = vrot.slane %v1337, 1
        %v1424 = vsel %vm431, %v1422, %v1423
        %v1425 = vrot.slane %v1338, 1
        %v1426 = vrot.slane %v1339, 1
        %v1427 = vsel %vm431, %v1425, %v1426
        %v1444 = vsel %vm431, %v1405, 0.0
        %v1445 = vsel %vm431, %v1408, 0.0
        %v1446 = vsel %vm431, %v1411, 0.0
        %v1447 = vsel %vm431, %v1414, 0.0
        %v1448 = vsel %vm431, %v1417, 0.0
        %v1449 = vsel %vm431, %v1420, 0.0
        %v1450 = vsel %vm431, %v1423, 0.0
        %v1451 = vsel %vm431, %v1426, 0.0
        %v1452 = vpack.c.bf16 %v1358, %v1396
        %v1453 = vpack.c.bf16 %v1325, %v1324
        %v1454 = vpack.c.bf16 %v1444, %v1406
        %v1455 = vpack.c.bf16 %v1361, %v1397
        %v1456 = vpack.c.bf16 %v1327, %v1326
        %v1457 = vpack.c.bf16 %v1445, %v1409
        %v1458 = vpack.c.bf16 %v1364, %v1398
        %v1459 = vpack.c.bf16 %v1329, %v1328
        %v1460 = vpack.c.bf16 %v1446, %v1412
        %v1461 = vpack.c.bf16 %v1367, %v1399
        %v1462 = vpack.c.bf16 %v1331, %v1330
        %v1463 = vpack.c.bf16 %v1447, %v1415
        %v1464 = vpack.c.bf16 %v1370, %v1400
        %v1465 = vpack.c.bf16 %v1333, %v1332
        %v1466 = vpack.c.bf16 %v1448, %v1418
        %v1467 = vpack.c.bf16 %v1373, %v1401
        %v1468 = vpack.c.bf16 %v1335, %v1334
        %v1469 = vpack.c.bf16 %v1449, %v1421
        %v1470 = vpack.c.bf16 %v1376, %v1402
        %v1471 = vpack.c.bf16 %v1337, %v1336
        %v1472 = vpack.c.bf16 %v1450, %v1424
        %v1473 = vpack.c.bf16 %v1379, %v1403
        %v1474 = vpack.c.bf16 %v1339, %v1338
        %v1475 = vpack.c.bf16 %v1451, %v1427
        %v1476 = vld [vmem:[#allocation7] sm:$0xf]
        %v1477 = vld [vmem:[#allocation7 + $0x4] sm:$0xf]
        %v1478 = vld [vmem:[#allocation7 + $0x8] sm:$0xf]
        %v1479 = vld [vmem:[#allocation7 + $0xc] sm:$0xf]
        %v1480 = vld [vmem:[#allocation7 + $0x10] sm:$0xf]
        %v1481 = vld [vmem:[#allocation7 + $0x14] sm:$0xf]
        %v1482 = vld [vmem:[#allocation7 + $0x18] sm:$0xf]
        %v1483 = vld [vmem:[#allocation7 + $0x1c] sm:$0xf]
        %v1484 = vld [vmem:[#allocation7 + $0x20] sm:$0xf]
        %v1485 = vld [vmem:[#allocation7 + $0x24] sm:$0xf]
        %v1486 = vld [vmem:[#allocation7 + $0x28] sm:$0xf]
        %v1487 = vld [vmem:[#allocation7 + $0x2c] sm:$0xf]
        %v1488 = vld [vmem:[#allocation7 + $0x30] sm:$0xf]
        %v1489 = vld [vmem:[#allocation7 + $0x34] sm:$0xf]
        %v1490 = vld [vmem:[#allocation7 + $0x38] sm:$0xf]
        %v1491 = vld [vmem:[#allocation7 + $0x3c] sm:$0xf]
        %v1492 = vld [vmem:[#allocation7 + $0x40] sm:$0xf]
        %v1493 = vld [vmem:[#allocation7 + $0x44] sm:$0xf]
        %v1494 = vld [vmem:[#allocation7 + $0x48] sm:$0xf]
        %v1495 = vld [vmem:[#allocation7 + $0x4c] sm:$0xf]
        %v1496 = vld [vmem:[#allocation7 + $0x50] sm:$0xf]
        %v1497 = vld [vmem:[#allocation7 + $0x54] sm:$0xf]
        %v1498 = vld [vmem:[#allocation7 + $0x58] sm:$0xf]
        %v1499 = vld [vmem:[#allocation7 + $0x5c] sm:$0xf]
        %v1500 = vld [vmem:[#allocation7 + $0x60] sm:$0xf]
        %v1501 = vld [vmem:[#allocation7 + $0x64] sm:$0xf]
        %v1502 = vld [vmem:[#allocation7 + $0x68] sm:$0xf]
        %v1503 = vld [vmem:[#allocation7 + $0x6c] sm:$0xf]
        %v1504 = vld [vmem:[#allocation7 + $0x70] sm:$0xf]
        %v1505 = vld [vmem:[#allocation7 + $0x74] sm:$0xf]
        %v1506 = vld [vmem:[#allocation7 + $0x78] sm:$0xf]
        %v1507 = vld [vmem:[#allocation7 + $0x7c] sm:$0xf]
        %v1508 = vld [vmem:[#allocation7 + $0x80] sm:$0xf]
        %v1509 = vld [vmem:[#allocation7 + $0x84] sm:$0xf]
        %v1510 = vld [vmem:[#allocation7 + $0x88] sm:$0xf]
        %v1511 = vld [vmem:[#allocation7 + $0x8c] sm:$0xf]
        %v1512 = vld [vmem:[#allocation7 + $0x90] sm:$0xf]
        %v1513 = vld [vmem:[#allocation7 + $0x94] sm:$0xf]
        %v1514 = vld [vmem:[#allocation7 + $0x98] sm:$0xf]
        %v1515 = vld [vmem:[#allocation7 + $0x9c] sm:$0xf]
        %v1516 = vld [vmem:[#allocation7 + $0xa0] sm:$0xf]
        %v1517 = vld [vmem:[#allocation7 + $0xa4] sm:$0xf]
        %v1518 = vld [vmem:[#allocation7 + $0xa8] sm:$0xf]
        %v1519 = vld [vmem:[#allocation7 + $0xac] sm:$0xf]
        %v1520 = vld [vmem:[#allocation7 + $0xb0] sm:$0xf]
        %v1521 = vld [vmem:[#allocation7 + $0xb4] sm:$0xf]
        %v1522 = vld [vmem:[#allocation7 + $0xb8] sm:$0xf]
        %v1523 = vld [vmem:[#allocation7 + $0xbc] sm:$0xf]
        %v1525 = vlaneseq
        %v1526 = vshrl.u32 %v1525, 7
        %v1527 = vsub.s32 0, %v1526
        %v1528 = vrot.slane %v331, %v1527
        %v1578 = vunpack.c.l.b16 %v1476
        %v1579 = vunpack.c.l.b16 %v1477
        %v1580 = vunpack.c.l.b16 %v1478
        %v1581 = vunpack.c.l.b16 %v1479
        %v1582 = vunpack.c.l.b16 %v1480
        %v1583 = vunpack.c.l.b16 %v1481
        %v1584 = vunpack.c.l.b16 %v1482
        %v1585 = vunpack.c.l.b16 %v1483
        %v1586 = vunpack.c.l.b16 %v1484
        %v1587 = vunpack.c.l.b16 %v1485
        %v1588 = vunpack.c.l.b16 %v1486
        %v1589 = vunpack.c.l.b16 %v1487
        %v1590 = vunpack.c.l.b16 %v1488
        %v1591 = vunpack.c.l.b16 %v1489
        %v1592 = vunpack.c.l.b16 %v1490
        %v1593 = vunpack.c.l.b16 %v1491
        %v1594 = vunpack.c.l.b16 %v1492
        %v1595 = vunpack.c.l.b16 %v1493
        %v1596 = vunpack.c.l.b16 %v1494
        %v1597 = vunpack.c.l.b16 %v1495
        %v1598 = vunpack.c.l.b16 %v1496
        %v1599 = vunpack.c.l.b16 %v1497
        %v1600 = vunpack.c.l.b16 %v1498
        %v1601 = vunpack.c.l.b16 %v1499
        %v1602 = vunpack.c.l.b16 %v1500
        %v1603 = vunpack.c.l.b16 %v1501
        %v1604 = vunpack.c.l.b16 %v1502
        %v1605 = vunpack.c.l.b16 %v1503
        %v1606 = vunpack.c.l.b16 %v1504
        %v1607 = vunpack.c.l.b16 %v1505
        %v1608 = vunpack.c.l.b16 %v1506
        %v1609 = vunpack.c.l.b16 %v1507
        %v1610 = vunpack.c.l.b16 %v1508
        %v1611 = vunpack.c.l.b16 %v1509
        %v1612 = vunpack.c.l.b16 %v1510
        %v1613 = vunpack.c.l.b16 %v1511
        %v1614 = vunpack.c.l.b16 %v1512
        %v1615 = vunpack.c.l.b16 %v1513
        %v1616 = vunpack.c.l.b16 %v1514
        %v1617 = vunpack.c.l.b16 %v1515
        %v1618 = vunpack.c.l.b16 %v1516
        %v1619 = vunpack.c.l.b16 %v1517
        %v1620 = vunpack.c.l.b16 %v1518
        %v1621 = vunpack.c.l.b16 %v1519
        %v1622 = vunpack.c.l.b16 %v1520
        %v1623 = vunpack.c.l.b16 %v1521
        %v1624 = vunpack.c.l.b16 %v1522
        %v1625 = vunpack.c.l.b16 %v1523
        %v1626 = vpack.c.b16 %v1579, %v1578
        %v1627 = vpack.c.b16 %v1581, %v1580
        %v1628 = vpack.c.b16 %v1583, %v1582
        %v1629 = vpack.c.b16 %v1585, %v1584
        %v1630 = vpack.c.b16 %v1587, %v1586
        %v1631 = vpack.c.b16 %v1589, %v1588
        %v1632 = vpack.c.b16 %v1591, %v1590
        %v1633 = vpack.c.b16 %v1593, %v1592
        %v1634 = vpack.c.b16 %v1595, %v1594
        %v1635 = vpack.c.b16 %v1597, %v1596
        %v1636 = vpack.c.b16 %v1599, %v1598
        %v1637 = vpack.c.b16 %v1601, %v1600
        %v1638 = vpack.c.b16 %v1603, %v1602
        %v1639 = vpack.c.b16 %v1605, %v1604
        %v1640 = vpack.c.b16 %v1607, %v1606
        %v1641 = vpack.c.b16 %v1609, %v1608
        %v1642 = vpack.c.b16 %v1611, %v1610
        %v1643 = vpack.c.b16 %v1613, %v1612
        %v1644 = vpack.c.b16 %v1615, %v1614
        %v1645 = vpack.c.b16 %v1617, %v1616
        %v1646 = vpack.c.b16 %v1619, %v1618
        %v1647 = vpack.c.b16 %v1621, %v1620
        %v1648 = vpack.c.b16 %v1623, %v1622
        %v1649 = vpack.c.b16 %v1625, %v1624
        %1674 = vmatprep.subr.bf16.mxu0 0
        %1675 = vmatpush1.bf16.msra.mxu0 %v1626
        %1676 = vmatprep.subr.bf16.mxu0 0
        %1677 = vmatpush1.bf16.msra.mxu0 %v1627
        %1678 = vmatprep.subr.bf16.mxu0 0
        %1679 = vmatpush1.bf16.msra.mxu0 %v1628
        %1680 = vmatprep.subr.bf16.mxu0 0
        %1681 = vmatpush1.bf16.msra.mxu0 %v1629
        %1682 = vmatprep.subr.bf16.mxu0 0
        %1683 = vmatpush1.bf16.msra.mxu0 %v1630
        %1684 = vmatprep.subr.bf16.mxu0 0
        %1685 = vmatpush1.bf16.msra.mxu0 %v1631
        %1686 = vmatprep.subr.bf16.mxu0 0
        %1687 = vmatpush1.bf16.msra.mxu0 %v1632
        %1688 = vmatprep.subr.bf16.mxu0 0
        %1689 = vmatpush1.bf16.msra.mxu0 %v1633
        %1690 = vmatprep.subr.bf16.mxu0 0
        %1691 = vmatpush1.bf16.msra.mxu0 %v1634
        %1692 = vmatprep.subr.bf16.mxu0 0
        %1693 = vmatpush1.bf16.msra.mxu0 %v1635
        %1694 = vmatprep.subr.bf16.mxu0 0
        %1695 = vmatpush1.bf16.msra.mxu0 %v1636
        %1696 = vmatprep.subr.bf16.mxu0 0
        %1697 = vmatpush1.bf16.msra.mxu0 %v1637
        %1698 = vmatprep.subr.bf16.mxu0 0
        %1699 = vmatpush1.bf16.msra.mxu0 %v1638
        %1700 = vmatprep.subr.bf16.mxu0 0
        %1701 = vmatpush1.bf16.msra.mxu0 %v1639
        %1702 = vmatprep.subr.bf16.mxu0 0
        %1703 = vmatpush1.bf16.msra.mxu0 %v1640
        %1704 = vmatprep.subr.bf16.mxu0 0
        %1705 = vmatpush1.bf16.msra.mxu0 %v1641
        %1706 = vmatprep.mubr.bf16.mxu0 %v1453
        %1707 = vmatmul.mubr.bf16.gmra.mrb[0].mxu0 %v1452
        %v1708 = vpop.f32.mrb[0].mxu0
        %v1709 = vadd.f32 %v1528, %v1708
        %v1710 = vpop.f32.mrb[0].mxu0
        %v1711 = vpop.f32.mrb[0].mxu0
        %v1712 = vadd.f32 %v1528, %v1711
        %v1713 = vpop.f32.mrb[0].mxu0
        %1714 = vmatprep.mubr.bf16.mxu0 %v1456
        %1715 = vmatmul.mubr.bf16.gmra.mrb[0].mxu0 %v1455
        %v1716 = vpop.f32.mrb[0].mxu0
        %v1717 = vadd.f32 %v1528, %v1716
        %v1718 = vpop.f32.mrb[0].mxu0
        %v1719 = vpop.f32.mrb[0].mxu0
        %v1720 = vadd.f32 %v1528, %v1719
        %v1721 = vpop.f32.mrb[0].mxu0
        %1722 = vmatprep.mubr.bf16.mxu0 %v1459
        %1723 = vmatmul.mubr.bf16.gmra.mrb[0].mxu0 %v1458
        %v1724 = vpop.f32.mrb[0].mxu0
        %v1725 = vadd.f32 %v1528, %v1724
        %v1726 = vpop.f32.mrb[0].mxu0
        %v1727 = vpop.f32.mrb[0].mxu0
        %v1728 = vadd.f32 %v1528, %v1727
        %v1729 = vpop.f32.mrb[0].mxu0
        %1730 = vmatprep.mubr.bf16.mxu0 %v1462
        %1731 = vmatmul.mubr.bf16.gmra.mrb[0].mxu0 %v1461
        %v1732 = vpop.f32.mrb[0].mxu0
        %v1733 = vadd.f32 %v1528, %v1732
        %v1734 = vpop.f32.mrb[0].mxu0
        %v1735 = vpop.f32.mrb[0].mxu0
        %v1736 = vadd.f32 %v1528, %v1735
        %v1737 = vpop.f32.mrb[0].mxu0
        %1738 = vmatprep.mubr.bf16.mxu0 %v1465
        %1739 = vmatmul.mubr.bf16.gmra.mrb[0].mxu0 %v1464
        %v1740 = vpop.f32.mrb[0].mxu0
        %v1741 = vadd.f32 %v1528, %v1740
        %v1742 = vpop.f32.mrb[0].mxu0
        %v1743 = vpop.f32.mrb[0].mxu0
        %v1744 = vadd.f32 %v1528, %v1743
        %v1745 = vpop.f32.mrb[0].mxu0
        %1746 = vmatprep.mubr.bf16.mxu0 %v1468
        %1747 = vmatmul.mubr.bf16.gmra.mrb[0].mxu0 %v1467
        %v1748 = vpop.f32.mrb[0].mxu0
        %v1749 = vadd.f32 %v1528, %v1748
        %v1750 = vpop.f32.mrb[0].mxu0
        %v1751 = vpop.f32.mrb[0].mxu0
        %v1752 = vadd.f32 %v1528, %v1751
        %v1753 = vpop.f32.mrb[0].mxu0
        %1754 = vmatprep.mubr.bf16.mxu0 %v1471
        %1755 = vmatmul.mubr.bf16.gmra.mrb[0].mxu0 %v1470
        %v1756 = vpop.f32.mrb[0].mxu0
        %v1757 = vadd.f32 %v1528, %v1756
        %v1758 = vpop.f32.mrb[0].mxu0
        %v1759 = vpop.f32.mrb[0].mxu0
        %v1760 = vadd.f32 %v1528, %v1759
        %v1761 = vpop.f32.mrb[0].mxu0
        %1762 = vmatprep.mubr.bf16.mxu0 %v1474
        %1763 = vmatmul.mubr.bf16.gmra.mrb[0].mxu0 %v1473
        %v1764 = vpop.f32.mrb[0].mxu0
        %v1765 = vadd.f32 %v1528, %v1764
        %v1766 = vpop.f32.mrb[0].mxu0
        %v1767 = vpop.f32.mrb[0].mxu0
        %v1768 = vadd.f32 %v1528, %v1767
        %v1769 = vpop.f32.mrb[0].mxu0
        %1770 = vdwg.mxu0
        %1771 = vmatprep.subr.bf16.mxu0 0
        %1772 = vmatpush1.bf16.msra.mxu0 %v1642
        %1773 = vmatprep.subr.bf16.mxu0 0
        %1774 = vmatpush1.bf16.msra.mxu0 %v1643
        %1775 = vmatprep.subr.bf16.mxu0 0
        %1776 = vmatpush1.bf16.msra.mxu0 %v1644
        %1777 = vmatprep.subr.bf16.mxu0 0
        %1778 = vmatpush1.bf16.msra.mxu0 %v1645
        %1779 = vmatprep.subr.bf16.mxu0 0
        %1780 = vmatpush1.bf16.msra.mxu0 %v1646
        %1781 = vmatprep.subr.bf16.mxu0 0
        %1782 = vmatpush1.bf16.msra.mxu0 %v1647
        %1783 = vmatprep.subr.bf16.mxu0 0
        %1784 = vmatpush1.bf16.msra.mxu0 %v1648
        %1785 = vmatprep.subr.bf16.mxu0 0
        %1786 = vmatpush1.bf16.msra.mxu0 %v1649
        %1787 = vmatprep.subr.bf16.mxu0 0
        %1788 = vmatpush1.bf16.msra.mxu0 0
        %1789 = vmatprep.subr.bf16.mxu0 0
        %1790 = vmatpush1.bf16.msra.mxu0 0
        %1791 = vmatprep.subr.bf16.mxu0 0
        %1792 = vmatpush1.bf16.msra.mxu0 0
        %1793 = vmatprep.subr.bf16.mxu0 0
        %1794 = vmatpush1.bf16.msra.mxu0 0
        %1795 = vmatprep.subr.bf16.mxu0 0
        %1796 = vmatpush1.bf16.msra.mxu0 0
        %1797 = vmatprep.subr.bf16.mxu0 0
        %1798 = vmatpush1.bf16.msra.mxu0 0
        %1799 = vmatprep.subr.bf16.mxu0 0
        %1800 = vmatpush1.bf16.msra.mxu0 0
        %1801 = vmatprep.subr.bf16.mxu0 0
        %1802 = vmatpush1.bf16.msra.mxu0 0
        %1803 = vmatprep.mubr.bf16.mxu0 0
        %1804 = vmatmul.mubr.bf16.gmra.mrb[0].mxu0 %v1454
        %v1805 = vpop.f32.mrb[0].mxu0
        %v1806 = vadd.f32 %v1709, %v1805
        %v1807 = vpop.f32.mrb[0].mxu0
        %v1808 = vpop.f32.mrb[0].mxu0
        %v1809 = vadd.f32 %v1712, %v1808
        %v1810 = vpop.f32.mrb[0].mxu0
        %1811 = vmatprep.mubr.bf16.mxu0 0
        %1812 = vmatmul.mubr.bf16.gmra.mrb[0].mxu0 %v1457
        %v1813 = vpop.f32.mrb[0].mxu0
        %v1814 = vadd.f32 %v1717, %v1813
        %v1815 = vpop.f32.mrb[0].mxu0
        %v1816 = vpop.f32.mrb[0].mxu0
        %v1817 = vadd.f32 %v1720, %v1816
        %v1818 = vpop.f32.mrb[0].mxu0
        %1819 = vmatprep.mubr.bf16.mxu0 0
        %1820 = vmatmul.mubr.bf16.gmra.mrb[0].mxu0 %v1460
        %v1821 = vpop.f32.mrb[0].mxu0
        %v1822 = vadd.f32 %v1725, %v1821
        %v1823 = vpop.f32.mrb[0].mxu0
        %v1824 = vpop.f32.mrb[0].mxu0
        %v1825 = vadd.f32 %v1728, %v1824
        %v1826 = vpop.f32.mrb[0].mxu0
        %1827 = vmatprep.mubr.bf16.mxu0 0
        %1828 = vmatmul.mubr.bf16.gmra.mrb[0].mxu0 %v1463
        %v1829 = vpop.f32.mrb[0].mxu0
        %v1830 = vadd.f32 %v1733, %v1829
        %v1831 = vpop.f32.mrb[0].mxu0
        %v1832 = vpop.f32.mrb[0].mxu0
        %v1833 = vadd.f32 %v1736, %v1832
        %v1834 = vpop.f32.mrb[0].mxu0
        %1835 = vmatprep.mubr.bf16.mxu0 0
        %1836 = vmatmul.mubr.bf16.gmra.mrb[0].mxu0 %v1466
        %v1837 = vpop.f32.mrb[0].mxu0
        %v1838 = vadd.f32 %v1741, %v1837
        %v1839 = vpop.f32.mrb[0].mxu0
        %v1840 = vpop.f32.mrb[0].mxu0
        %v1841 = vadd.f32 %v1744, %v1840
        %v1842 = vpop.f32.mrb[0].mxu0
        %1843 = vmatprep.mubr.bf16.mxu0 0
        %1844 = vmatmul.mubr.bf16.gmra.mrb[0].mxu0 %v1469
        %v1845 = vpop.f32.mrb[0].mxu0
        %v1846 = vadd.f32 %v1749, %v1845
        %v1847 = vpop.f32.mrb[0].mxu0
        %v1848 = vpop.f32.mrb[0].mxu0
        %v1849 = vadd.f32 %v1752, %v1848
        %v1850 = vpop.f32.mrb[0].mxu0
        %1851 = vmatprep.mubr.bf16.mxu0 0
        %1852 = vmatmul.mubr.bf16.gmra.mrb[0].mxu0 %v1472
        %v1853 = vpop.f32.mrb[0].mxu0
        %v1854 = vadd.f32 %v1757, %v1853
        %v1855 = vpop.f32.mrb[0].mxu0
        %v1856 = vpop.f32.mrb[0].mxu0
        %v1857 = vadd.f32 %v1760, %v1856
        %v1858 = vpop.f32.mrb[0].mxu0
        %1859 = vmatprep.mubr.bf16.mxu0 0
        %1860 = vmatmul.mubr.bf16.gmra.mrb[0].mxu0 %v1475
        %v1861 = vpop.f32.mrb[0].mxu0
        %v1862 = vadd.f32 %v1765, %v1861
        %v1863 = vpop.f32.mrb[0].mxu0
        %v1864 = vpop.f32.mrb[0].mxu0
        %v1865 = vadd.f32 %v1768, %v1864
        %v1866 = vpop.f32.mrb[0].mxu0
        %1867 = vdwg.mxu0
        %v1868 = vadd.f32 %v1806, %v350
        %v1869 = vadd.f32 %v1809, %v351
        %v1870 = vadd.f32 %v1814, %v352
        %v1871 = vadd.f32 %v1817, %v353
        %v1872 = vadd.f32 %v1822, %v354
        %v1873 = vadd.f32 %v1825, %v355
        %v1874 = vadd.f32 %v1830, %v356
        %v1875 = vadd.f32 %v1833, %v357
        %v1876 = vadd.f32 %v1838, %v358
        %v1877 = vadd.f32 %v1841, %v359
        %v1878 = vadd.f32 %v1846, %v360
        %v1879 = vadd.f32 %v1849, %v361
        %v1880 = vadd.f32 %v1854, %v362
        %v1881 = vadd.f32 %v1857, %v363
        %v1882 = vadd.f32 %v1862, %v364
        %v1883 = vadd.f32 %v1865, %v365
        %v1884 = vmul.f32 %v900, %v1868
        %v1885 = vmul.f32 %v900, %v1869
        %v1886 = vmul.f32 %v900, %v1870
        %v1887 = vmul.f32 %v900, %v1871
        %v1888 = vmul.f32 %v900, %v1872
        %v1889 = vmul.f32 %v900, %v1873
        %v1890 = vmul.f32 %v900, %v1874
        %v1891 = vmul.f32 %v900, %v1875
        %v1892 = vmul.f32 %v900, %v1876
        %v1893 = vmul.f32 %v900, %v1877
        %v1894 = vmul.f32 %v900, %v1878
        %v1895 = vmul.f32 %v900, %v1879
        %v1896 = vmul.f32 %v900, %v1880
        %v1897 = vmul.f32 %v900, %v1881
        %v1898 = vmul.f32 %v900, %v1882
        %v1899 = vmul.f32 %v900, %v1883
        %v1900 = vadd.f32 %v1884, %v922
        %v1901 = vadd.f32 %v1885, %v922
        %v1902 = vadd.f32 %v1886, %v922
        %v1903 = vadd.f32 %v1887, %v922
        %v1904 = vadd.f32 %v1888, %v922
        %v1905 = vadd.f32 %v1889, %v922
        %v1906 = vadd.f32 %v1890, %v922
        %v1907 = vadd.f32 %v1891, %v922
        %v1908 = vadd.f32 %v1892, %v922
        %v1909 = vadd.f32 %v1893, %v922
        %v1910 = vadd.f32 %v1894, %v922
        %v1911 = vadd.f32 %v1895, %v922
        %v1912 = vadd.f32 %v1896, %v922
        %v1913 = vadd.f32 %v1897, %v922
        %v1914 = vadd.f32 %v1898, %v922
        %v1915 = vadd.f32 %v1899, %v922
        %v1916 = vmul.f32 %v1900, %v1868
        %v1917 = vmul.f32 %v1901, %v1869
        %v1918 = vmul.f32 %v1902, %v1870
        %v1919 = vmul.f32 %v1903, %v1871
        %v1920 = vmul.f32 %v1904, %v1872
        %v1921 = vmul.f32 %v1905, %v1873
        %v1922 = vmul.f32 %v1906, %v1874
        %v1923 = vmul.f32 %v1907, %v1875
        %v1924 = vmul.f32 %v1908, %v1876
        %v1925 = vmul.f32 %v1909, %v1877
        %v1926 = vmul.f32 %v1910, %v1878
        %v1927 = vmul.f32 %v1911, %v1879
        %v1928 = vmul.f32 %v1912, %v1880
        %v1929 = vmul.f32 %v1913, %v1881
        %v1930 = vmul.f32 %v1914, %v1882
        %v1931 = vmul.f32 %v1915, %v1883
        %v1932 = vadd.f32 %v1916, %v960
        %v1933 = vadd.f32 %v1917, %v960
        %v1934 = vadd.f32 %v1918, %v960
        %v1935 = vadd.f32 %v1919, %v960
        %v1936 = vadd.f32 %v1920, %v960
        %v1937 = vadd.f32 %v1921, %v960
        %v1938 = vadd.f32 %v1922, %v960
        %v1939 = vadd.f32 %v1923, %v960
        %v1940 = vadd.f32 %v1924, %v960
        %v1941 = vadd.f32 %v1925, %v960
        %v1942 = vadd.f32 %v1926, %v960
        %v1943 = vadd.f32 %v1927, %v960
        %v1944 = vadd.f32 %v1928, %v960
        %v1945 = vadd.f32 %v1929, %v960
        %v1946 = vadd.f32 %v1930, %v960
        %v1947 = vadd.f32 %v1931, %v960
        %v1948 = vmul.f32 %v1932, %v1868
        %v1949 = vmul.f32 %v1933, %v1869
        %v1950 = vmul.f32 %v1934, %v1870
        %v1951 = vmul.f32 %v1935, %v1871
        %v1952 = vmul.f32 %v1936, %v1872
        %v1953 = vmul.f32 %v1937, %v1873
        %v1954 = vmul.f32 %v1938, %v1874
        %v1955 = vmul.f32 %v1939, %v1875
        %v1956 = vmul.f32 %v1940, %v1876
        %v1957 = vmul.f32 %v1941, %v1877
        %v1958 = vmul.f32 %v1942, %v1878
        %v1959 = vmul.f32 %v1943, %v1879
        %v1960 = vmul.f32 %v1944, %v1880
        %v1961 = vmul.f32 %v1945, %v1881
        %v1962 = vmul.f32 %v1946, %v1882
        %v1963 = vmul.f32 %v1947, %v1883
        %v1964 = vadd.f32 %v1948, %v998
        %v1965 = vadd.f32 %v1949, %v998
        %v1966 = vadd.f32 %v1950, %v998
        %v1967 = vadd.f32 %v1951, %v998
        %v1968 = vadd.f32 %v1952, %v998
        %v1969 = vadd.f32 %v1953, %v998
        %v1970 = vadd.f32 %v1954, %v998
        %v1971 = vadd.f32 %v1955, %v998
        %v1972 = vadd.f32 %v1956, %v998
        %v1973 = vadd.f32 %v1957, %v998
        %v1974 = vadd.f32 %v1958, %v998
        %v1975 = vadd.f32 %v1959, %v998
        %v1976 = vadd.f32 %v1960, %v998
        %v1977 = vadd.f32 %v1961, %v998
        %v1978 = vadd.f32 %v1962, %v998
        %v1979 = vadd.f32 %v1963, %v998
        %v1980 = vmul.f32 %v1964, %v1868
        %v1981 = vmul.f32 %v1965, %v1869
        %v1982 = vmul.f32 %v1966, %v1870
        %v1983 = vmul.f32 %v1967, %v1871
        %v1984 = vmul.f32 %v1968, %v1872
        %v1985 = vmul.f32 %v1969, %v1873
        %v1986 = vmul.f32 %v1970, %v1874
        %v1987 = vmul.f32 %v1971, %v1875
        %v1988 = vmul.f32 %v1972, %v1876
        %v1989 = vmul.f32 %v1973, %v1877
        %v1990 = vmul.f32 %v1974, %v1878
        %v1991 = vmul.f32 %v1975, %v1879
        %v1992 = vmul.f32 %v1976, %v1880
        %v1993 = vmul.f32 %v1977, %v1881
        %v1994 = vmul.f32 %v1978, %v1882
        %v1995 = vmul.f32 %v1979, %v1883
        %v1996 = vadd.f32 %v1980, %v1036
        %v1997 = vadd.f32 %v1981, %v1036
        %v1998 = vadd.f32 %v1982, %v1036
        %v1999 = vadd.f32 %v1983, %v1036
        %v2000 = vadd.f32 %v1984, %v1036
        %v2001 = vadd.f32 %v1985, %v1036
        %v2002 = vadd.f32 %v1986, %v1036
        %v2003 = vadd.f32 %v1987, %v1036
        %v2004 = vadd.f32 %v1988, %v1036
        %v2005 = vadd.f32 %v1989, %v1036
        %v2006 = vadd.f32 %v1990, %v1036
        %v2007 = vadd.f32 %v1991, %v1036
        %v2008 = vadd.f32 %v1992, %v1036
        %v2009 = vadd.f32 %v1993, %v1036
        %v2010 = vadd.f32 %v1994, %v1036
        %v2011 = vadd.f32 %v1995, %v1036
        %v2012 = vmul.f32 %v1996, %v1868
        %v2013 = vmul.f32 %v1997, %v1869
        %v2014 = vmul.f32 %v1998, %v1870
        %v2015 = vmul.f32 %v1999, %v1871
        %v2016 = vmul.f32 %v2000, %v1872
        %v2017 = vmul.f32 %v2001, %v1873
        %v2018 = vmul.f32 %v2002, %v1874
        %v2019 = vmul.f32 %v2003, %v1875
        %v2020 = vmul.f32 %v2004, %v1876
        %v2021 = vmul.f32 %v2005, %v1877
        %v2022 = vmul.f32 %v2006, %v1878
        %v2023 = vmul.f32 %v2007, %v1879
        %v2024 = vmul.f32 %v2008, %v1880
        %v2025 = vmul.f32 %v2009, %v1881
        %v2026 = vmul.f32 %v2010, %v1882
        %v2027 = vmul.f32 %v2011, %v1883
        %v2028 = vadd.f32 %v2012, %v1074
        %v2029 = vadd.f32 %v2013, %v1074
        %v2030 = vadd.f32 %v2014, %v1074
        %v2031 = vadd.f32 %v2015, %v1074
        %v2032 = vadd.f32 %v2016, %v1074
        %v2033 = vadd.f32 %v2017, %v1074
        %v2034 = vadd.f32 %v2018, %v1074
        %v2035 = vadd.f32 %v2019, %v1074
        %v2036 = vadd.f32 %v2020, %v1074
        %v2037 = vadd.f32 %v2021, %v1074
        %v2038 = vadd.f32 %v2022, %v1074
        %v2039 = vadd.f32 %v2023, %v1074
        %v2040 = vadd.f32 %v2024, %v1074
        %v2041 = vadd.f32 %v2025, %v1074
        %v2042 = vadd.f32 %v2026, %v1074
        %v2043 = vadd.f32 %v2027, %v1074
        %v2044 = vmul.f32 %v1096, %v1868
        %v2045 = vmul.f32 %v1096, %v1869
        %v2046 = vmul.f32 %v1096, %v1870
        %v2047 = vmul.f32 %v1096, %v1871
        %v2048 = vmul.f32 %v1096, %v1872
        %v2049 = vmul.f32 %v1096, %v1873
        %v2050 = vmul.f32 %v1096, %v1874
        %v2051 = vmul.f32 %v1096, %v1875
        %v2052 = vmul.f32 %v1096, %v1876
        %v2053 = vmul.f32 %v1096, %v1877
        %v2054 = vmul.f32 %v1096, %v1878
        %v2055 = vmul.f32 %v1096, %v1879
        %v2056 = vmul.f32 %v1096, %v1880
        %v2057 = vmul.f32 %v1096, %v1881
        %v2058 = vmul.f32 %v1096, %v1882
        %v2059 = vmul.f32 %v1096, %v1883
        %v2060 = vadd.f32 %v2044, %v1118
        %v2061 = vadd.f32 %v2045, %v1118
        %v2062 = vadd.f32 %v2046, %v1118
        %v2063 = vadd.f32 %v2047, %v1118
        %v2064 = vadd.f32 %v2048, %v1118
        %v2065 = vadd.f32 %v2049, %v1118
        %v2066 = vadd.f32 %v2050, %v1118
        %v2067 = vadd.f32 %v2051, %v1118
        %v2068 = vadd.f32 %v2052, %v1118
        %v2069 = vadd.f32 %v2053, %v1118
        %v2070 = vadd.f32 %v2054, %v1118
        %v2071 = vadd.f32 %v2055, %v1118
        %v2072 = vadd.f32 %v2056, %v1118
        %v2073 = vadd.f32 %v2057, %v1118
        %v2074 = vadd.f32 %v2058, %v1118
        %v2075 = vadd.f32 %v2059, %v1118
        %v2076 = vmul.f32 %v2060, %v1868
        %v2077 = vmul.f32 %v2061, %v1869
        %v2078 = vmul.f32 %v2062, %v1870
        %v2079 = vmul.f32 %v2063, %v1871
        %v2080 = vmul.f32 %v2064, %v1872
        %v2081 = vmul.f32 %v2065, %v1873
        %v2082 = vmul.f32 %v2066, %v1874
        %v2083 = vmul.f32 %v2067, %v1875
        %v2084 = vmul.f32 %v2068, %v1876
        %v2085 = vmul.f32 %v2069, %v1877
        %v2086 = vmul.f32 %v2070, %v1878
        %v2087 = vmul.f32 %v2071, %v1879
        %v2088 = vmul.f32 %v2072, %v1880
        %v2089 = vmul.f32 %v2073, %v1881
        %v2090 = vmul.f32 %v2074, %v1882
        %v2091 = vmul.f32 %v2075, %v1883
        %v2092 = vadd.f32 %v2076, %v1156
        %v2093 = vadd.f32 %v2077, %v1156
        %v2094 = vadd.f32 %v2078, %v1156
        %v2095 = vadd.f32 %v2079, %v1156
        %v2096 = vadd.f32 %v2080, %v1156
        %v2097 = vadd.f32 %v2081, %v1156
        %v2098 = vadd.f32 %v2082, %v1156
        %v2099 = vadd.f32 %v2083, %v1156
        %v2100 = vadd.f32 %v2084, %v1156
        %v2101 = vadd.f32 %v2085, %v1156
        %v2102 = vadd.f32 %v2086, %v1156
        %v2103 = vadd.f32 %v2087, %v1156
        %v2104 = vadd.f32 %v2088, %v1156
        %v2105 = vadd.f32 %v2089, %v1156
        %v2106 = vadd.f32 %v2090, %v1156
        %v2107 = vadd.f32 %v2091, %v1156
        %v2108 = vmul.f32 %v2092, %v1868
        %v2109 = vmul.f32 %v2093, %v1869
        %v2110 = vmul.f32 %v2094, %v1870
        %v2111 = vmul.f32 %v2095, %v1871
        %v2112 = vmul.f32 %v2096, %v1872
        %v2113 = vmul.f32 %v2097, %v1873
        %v2114 = vmul.f32 %v2098, %v1874
        %v2115 = vmul.f32 %v2099, %v1875
        %v2116 = vmul.f32 %v2100, %v1876
        %v2117 = vmul.f32 %v2101, %v1877
        %v2118 = vmul.f32 %v2102, %v1878
        %v2119 = vmul.f32 %v2103, %v1879
        %v2120 = vmul.f32 %v2104, %v1880
        %v2121 = vmul.f32 %v2105, %v1881
        %v2122 = vmul.f32 %v2106, %v1882
        %v2123 = vmul.f32 %v2107, %v1883
        %v2124 = vadd.f32 %v2108, %v1194
        %v2125 = vadd.f32 %v2109, %v1194
        %v2126 = vadd.f32 %v2110, %v1194
        %v2127 = vadd.f32 %v2111, %v1194
        %v2128 = vadd.f32 %v2112, %v1194
        %v2129 = vadd.f32 %v2113, %v1194
        %v2130 = vadd.f32 %v2114, %v1194
        %v2131 = vadd.f32 %v2115, %v1194
        %v2132 = vadd.f32 %v2116, %v1194
        %v2133 = vadd.f32 %v2117, %v1194
        %v2134 = vadd.f32 %v2118, %v1194
        %v2135 = vadd.f32 %v2119, %v1194
        %v2136 = vadd.f32 %v2120, %v1194
        %v2137 = vadd.f32 %v2121, %v1194
        %v2138 = vadd.f32 %v2122, %v1194
        %v2139 = vadd.f32 %v2123, %v1194
        %v2140 = vmul.f32 %v2124, %v1868
        %v2141 = vmul.f32 %v2125, %v1869
        %v2142 = vmul.f32 %v2126, %v1870
        %v2143 = vmul.f32 %v2127, %v1871
        %v2144 = vmul.f32 %v2128, %v1872
        %v2145 = vmul.f32 %v2129, %v1873
        %v2146 = vmul.f32 %v2130, %v1874
        %v2147 = vmul.f32 %v2131, %v1875
        %v2148 = vmul.f32 %v2132, %v1876
        %v2149 = vmul.f32 %v2133, %v1877
        %v2150 = vmul.f32 %v2134, %v1878
        %v2151 = vmul.f32 %v2135, %v1879
        %v2152 = vmul.f32 %v2136, %v1880
        %v2153 = vmul.f32 %v2137, %v1881
        %v2154 = vmul.f32 %v2138, %v1882
        %v2155 = vmul.f32 %v2139, %v1883
        %v2156 = vand.u32 2147483647, %v2140
        %v2157 = vand.u32 2147483647, %v2141
        %v2158 = vand.u32 2147483647, %v2142
        %v2159 = vand.u32 2147483647, %v2143
        %v2160 = vand.u32 2147483647, %v2144
        %v2161 = vand.u32 2147483647, %v2145
        %v2162 = vand.u32 2147483647, %v2146
        %v2163 = vand.u32 2147483647, %v2147
        %v2164 = vand.u32 2147483647, %v2148
        %v2165 = vand.u32 2147483647, %v2149
        %v2166 = vand.u32 2147483647, %v2150
        %v2167 = vand.u32 2147483647, %v2151
        %v2168 = vand.u32 2147483647, %v2152
        %v2169 = vand.u32 2147483647, %v2153
        %v2170 = vand.u32 2147483647, %v2154
        %v2171 = vand.u32 2147483647, %v2155
        %v2172 = vadd.f32 %v2156, 1.0
        %v2173 = vadd.f32 %v2157, 1.0
        %v2174 = vadd.f32 %v2158, 1.0
        %v2175 = vadd.f32 %v2159, 1.0
        %v2176 = vadd.f32 %v2160, 1.0
        %v2177 = vadd.f32 %v2161, 1.0
        %v2178 = vadd.f32 %v2162, 1.0
        %v2179 = vadd.f32 %v2163, 1.0
        %v2180 = vadd.f32 %v2164, 1.0
        %v2181 = vadd.f32 %v2165, 1.0
        %v2182 = vadd.f32 %v2166, 1.0
        %v2183 = vadd.f32 %v2167, 1.0
        %v2184 = vadd.f32 %v2168, 1.0
        %v2185 = vadd.f32 %v2169, 1.0
        %v2186 = vadd.f32 %v2170, 1.0
        %v2187 = vadd.f32 %v2171, 1.0
        %v2188 = vrcp.pop %v2172
        %v2189 = vrcp.pop %v2173
        %v2190 = vrcp.pop %v2174
        %v2191 = vrcp.pop %v2175
        %v2192 = vrcp.pop %v2176
        %v2193 = vrcp.pop %v2177
        %v2194 = vrcp.pop %v2178
        %v2195 = vrcp.pop %v2179
        %v2196 = vrcp.pop %v2180
        %v2197 = vrcp.pop %v2181
        %v2198 = vrcp.pop %v2182
        %v2199 = vrcp.pop %v2183
        %v2200 = vrcp.pop %v2184
        %v2201 = vrcp.pop %v2185
        %v2202 = vrcp.pop %v2186
        %v2203 = vrcp.pop %v2187
        %v2204 = vmul.f32 %v2172, %v2188
        %v2205 = vmul.f32 %v2173, %v2189
        %v2206 = vmul.f32 %v2174, %v2190
        %v2207 = vmul.f32 %v2175, %v2191
        %v2208 = vmul.f32 %v2176, %v2192
        %v2209 = vmul.f32 %v2177, %v2193
        %v2210 = vmul.f32 %v2178, %v2194
        %v2211 = vmul.f32 %v2179, %v2195
        %v2212 = vmul.f32 %v2180, %v2196
        %v2213 = vmul.f32 %v2181, %v2197
        %v2214 = vmul.f32 %v2182, %v2198
        %v2215 = vmul.f32 %v2183, %v2199
        %v2216 = vmul.f32 %v2184, %v2200
        %v2217 = vmul.f32 %v2185, %v2201
        %v2218 = vmul.f32 %v2186, %v2202
        %v2219 = vmul.f32 %v2187, %v2203
        %v2220 = vsub.f32 2.0, %v2204
        %v2221 = vsub.f32 2.0, %v2205
        %v2222 = vsub.f32 2.0, %v2206
        %v2223 = vsub.f32 2.0, %v2207
        %v2224 = vsub.f32 2.0, %v2208
        %v2225 = vsub.f32 2.0, %v2209
        %v2226 = vsub.f32 2.0, %v2210
        %v2227 = vsub.f32 2.0, %v2211
        %v2228 = vsub.f32 2.0, %v2212
        %v2229 = vsub.f32 2.0, %v2213
        %v2230 = vsub.f32 2.0, %v2214
        %v2231 = vsub.f32 2.0, %v2215
        %v2232 = vsub.f32 2.0, %v2216
        %v2233 = vsub.f32 2.0, %v2217
        %v2234 = vsub.f32 2.0, %v2218
        %v2235 = vsub.f32 2.0, %v2219
        %v2236 = vmul.f32 %v2188, %v2220
        %v2237 = vmul.f32 %v2189, %v2221
        %v2238 = vmul.f32 %v2190, %v2222
        %v2239 = vmul.f32 %v2191, %v2223
        %v2240 = vmul.f32 %v2192, %v2224
        %v2241 = vmul.f32 %v2193, %v2225
        %v2242 = vmul.f32 %v2194, %v2226
        %v2243 = vmul.f32 %v2195, %v2227
        %v2244 = vmul.f32 %v2196, %v2228
        %v2245 = vmul.f32 %v2197, %v2229
        %v2246 = vmul.f32 %v2198, %v2230
        %v2247 = vmul.f32 %v2199, %v2231
        %v2248 = vmul.f32 %v2200, %v2232
        %v2249 = vmul.f32 %v2201, %v2233
        %v2250 = vmul.f32 %v2202, %v2234
        %v2251 = vmul.f32 %v2203, %v2235
        %v2252 = vmul.f32 %v2028, %v2236
        %v2253 = vmul.f32 %v2029, %v2237
        %v2254 = vmul.f32 %v2030, %v2238
        %v2255 = vmul.f32 %v2031, %v2239
        %v2256 = vmul.f32 %v2032, %v2240
        %v2257 = vmul.f32 %v2033, %v2241
        %v2258 = vmul.f32 %v2034, %v2242
        %v2259 = vmul.f32 %v2035, %v2243
        %v2260 = vmul.f32 %v2036, %v2244
        %v2261 = vmul.f32 %v2037, %v2245
        %v2262 = vmul.f32 %v2038, %v2246
        %v2263 = vmul.f32 %v2039, %v2247
        %v2264 = vmul.f32 %v2040, %v2248
        %v2265 = vmul.f32 %v2041, %v2249
        %v2266 = vmul.f32 %v2042, %v2250
        %v2267 = vmul.f32 %v2043, %v2251
        %2268 = vst [vmem:[%s326] sm:$0xff] %v2252
        %2269 = vst [vmem:[%s326 + $0x8] sm:$0xff] %v2253
        %2270 = vst [vmem:[%s326 + $0x10] sm:$0xff] %v2254
        %2271 = vst [vmem:[%s326 + $0x18] sm:$0xff] %v2255
        %2272 = vst [vmem:[%s326 + $0x20] sm:$0xff] %v2256
        %2273 = vst [vmem:[%s326 + $0x28] sm:$0xff] %v2257
        %2274 = vst [vmem:[%s326 + $0x30] sm:$0xff] %v2258
        %2275 = vst [vmem:[%s326 + $0x38] sm:$0xff] %v2259
        %2276 = vst [vmem:[%s326 + $0x40] sm:$0xff] %v2260
        %2277 = vst [vmem:[%s326 + $0x48] sm:$0xff] %v2261
        %2278 = vst [vmem:[%s326 + $0x50] sm:$0xff] %v2262
        %2279 = vst [vmem:[%s326 + $0x58] sm:$0xff] %v2263
        %2280 = vst [vmem:[%s326 + $0x60] sm:$0xff] %v2264
        %2281 = vst [vmem:[%s326 + $0x68] sm:$0xff] %v2265
        %2282 = vst [vmem:[%s326 + $0x70] sm:$0xff] %v2266
        %2283 = vst [vmem:[%s326 + $0x78] sm:$0xff] %v2267
        %s2284 = sand.u32 %s185, 1
        %s2285 = scalar_lea.sflag [#allocation4], %s2284
        %s2286 = sand.u32 %s185, 1
        %s2287 = smul.addr %s2286, 128
        %s2288 = scalar_lea.vmem [#allocation8], %s2287
        // Predicated region
        $region61: #{tpu_custom_call.1} parent=47 // pred_check
          %p2289 = pneg %p195
        $region62: #{tpu_custom_call.1} parent=47 // pred_check_branch
          %2291 = sbr.rel (%p2289) target = $region64
        $region63: #{tpu_custom_call.1} parent=47 // pred_region
          %s2292 = smul.u32 8, %s25
          %s2294 = ssub.s32 2048, 2048
          %2295 = vsyncadd %s2285, %s2294
          %s2296 = smul.addr %s2292, 2
          %s2297 = smul.addr %s2296, 128
          %s2298 = scalar_lea.hbm %s7, %s2297
          %s2299 = sshll.u32 %s2288, 4
          %s2300 = int_to_ptr.vmem [resolvable:$true] %s2299
          %2305 = dma.vmem_to_hbm [thread:$0]  %s2300, 2048, %s2298, %s2285, 128, 128, 8
        $region64: #{tpu_custom_call.1} parent=47 // pred_fallthru
          _
      $region48: #{tpu_custom_call.1} parent=5 // pred_fallthru
        _
      %p2306 = scmp.le.s32.totalorder 2, %s20
      // Predicated region
      $region65: #{tpu_custom_call.1} parent=5 // pred_check
        %p2307 = pneg %p2306
      $region66: #{tpu_custom_call.1} parent=5 // pred_check_branch
        %2309 = sbr.rel (%p2307) target = $region68
      $region67: #{tpu_custom_call.1} parent=5 // pred_region
        %s2310 = ssub.s32 %s20, 2
        // Predicated region
        $region69: #{tpu_custom_call.1} parent=67 // pred_check
          %p2311 = pneg %p201
        $region70: #{tpu_custom_call.1} parent=67 // pred_check_branch
          %2313 = sbr.rel (%p2311) target = $region72
        $region71: #{tpu_custom_call.1} parent=67 // pred_region
          %s2314 = sand.u32 %s186, 1
          %s2315 = scalar_lea.sflag [#allocation4], %s2314
          %s2316 = sand.u32 %s186, 1
          %s2317 = smul.addr %s2316, 128
          %s2318 = scalar_lea.vmem [#allocation8], %s2317
          %2319 = dma.done %s2315, 2048
        $region72: #{tpu_custom_call.1} parent=67 // pred_fallthru
          _
      $region68: #{tpu_custom_call.1} parent=5 // pred_fallthru
        _
    $region6: #{tpu_custom_call.1} parent=1 // loop_footer
      %s24 = sadd.s32 1, %s20
    $region7: #{tpu_custom_call.1} parent=1 // loop_footer_branch
      %19 = sbr.rel target = $region3
    $region8: #{tpu_custom_call.1} parent=1 // loop_exit
      _
    %2320 = vsyncpa [#allocation3], 1
    %s2321 = scalar_lea.sflag [#allocation3], 1
    %2322 = vsyncpa %s2321, 1
    %2323 = vsyncpa [#allocation6], 1
    %2324 = vsyncpa [#allocation4], 1
    %s2325 = scalar_lea.sflag [#allocation4], 1
    %2326 = vsyncpa %s2325, 1

</llo_original>
